<compile_context>
chip_gen: v5e
topology: v5e:2x2
jax: 0.10.0
libtpu: 0.0.40
codegen_flags: <defaults>
</compile_context>

<pallas_src>
import functools

import jax
import jax.numpy as jnp
import numpy as np
from jax import lax
from jax.experimental import pallas as pl
from jax.experimental.pallas import tpu as pltpu  # noqa: F401  (kept for parity)

# ---------------- config (SiglipVisionConfig, small) ----------------
HIDDEN = 32          # hidden_size
HEADS = 4            # num_attention_heads
HEAD_DIM = HIDDEN // HEADS
INTER = 64           # intermediate_size
LAYERS = 2           # num_hidden_layers
EPS = 1e-6           # layer_norm_eps
# attention_dropout = 0.0 -> dropout is identity (eval semantics)

BATCH = 2
SEQ = 8


def _layernorm(x, w, b):
    mu = jnp.mean(x, axis=-1, keepdims=True)
    var = jnp.mean((x - mu) ** 2, axis=-1, keepdims=True)
    return (x - mu) * lax.rsqrt(var + EPS) * w + b


def _gelu_tanh(x):
    c = 0.7978845608028654  # sqrt(2/pi)
    return 0.5 * x * (1.0 + jnp.tanh(c * (x + 0.044715 * x * x * x)))


def encoder_kernel(x_ref, ln1w_ref, ln1b_ref, wqkv_ref, bqkv_ref, wo_ref, bo_ref,
                   ln2w_ref, ln2b_ref, w1_ref, b1_ref, w2_ref, b2_ref, o_ref,
                   *, layers, batch, seq, heads, head_dim):
    """Full SiglipEncoder (all layers) in one kernel invocation."""
    d = heads * head_dim
    h = x_ref[...].astype(jnp.float32)                      # (B*S, D) residual

    for l in range(layers):                                 # static, fully unrolled
        # ---------------- LayerNorm1 + fused QKV projection ----------------
        hn = _layernorm(h, ln1w_ref[l], ln1b_ref[l])
        # Wq (and bq) were pre-scaled by head_dim**-0.5 host-side.
        qkv = jnp.dot(hn, wqkv_ref[l],
                      preferred_element_type=jnp.float32) + bqkv_ref[l]  # (B*S, 3D)
        wo = wo_ref[l]                                      # (D, D)

        # ---------------- attention: batched over B, loop over heads -------
        attn = None
        for hh in range(heads):
            c0 = hh * head_dim
            q_h = qkv[:, c0:c0 + head_dim].reshape(batch, seq, head_dim)
            k_h = qkv[:, d + c0:d + c0 + head_dim].reshape(batch, seq, head_dim)
            v_h = qkv[:, 2 * d + c0:2 * d + c0 + head_dim].reshape(batch, seq, head_dim)

            s = jnp.einsum("bqd,bkd->bqk", q_h, k_h,
                           preferred_element_type=jnp.float32)      # (B, S, S)
            s = s - jnp.max(s, axis=-1, keepdims=True)               # stable softmax (f32)
            p = jnp.exp(s)
            p = p * pl.reciprocal(jnp.sum(p, axis=-1, keepdims=True), approx=True)
            o_h = jnp.einsum("bqk,bkd->bqd", p, v_h,
                             preferred_element_type=jnp.float32)     # (B, S, hd)

            # Fold head output straight into the out-projection row-block:
            # attn @ Wo == sum_h o_h @ Wo[h*hd:(h+1)*hd, :]  -> no concat needed.
            contrib = jnp.dot(o_h.reshape(batch * seq, head_dim),
                              wo[c0:c0 + head_dim, :],
                              preferred_element_type=jnp.float32)    # (B*S, D)
            attn = contrib if attn is None else attn + contrib

        h = h + attn + bo_ref[l]                            # residual add (+ out bias)

        # ---------------- LayerNorm2 + MLP ----------------
        hn2 = _layernorm(h, ln2w_ref[l], ln2b_ref[l])
        m = jnp.dot(hn2, w1_ref[l], preferred_element_type=jnp.float32) + b1_ref[l]
        m = _gelu_tanh(m)
        m = jnp.dot(m, w2_ref[l], preferred_element_type=jnp.float32) + b2_ref[l]
        h = h + m                                           # residual add

    o_ref[...] = h.astype(o_ref.dtype)


def siglip_encoder(x, params):
    B, S, D = x.shape
    L = params["wq"].shape[0]
    scale = (D // HEADS) ** (-0.5)

    # Fuse q/k/v weights into one (L, D, 3D) matmul; fold the attention scale
    # into Wq and bq so the kernel never multiplies by `scale`.
    wqkv = jnp.concatenate([params["wq"] * scale, params["wk"], params["wv"]], axis=-1)
    bqkv = jnp.concatenate([params["bq"] * scale, params["bk"], params["bv"]], axis=-1)

    x2 = x.reshape(B * S, D)
    kernel = functools.partial(encoder_kernel, layers=L, batch=B, seq=S,
                               heads=HEADS, head_dim=D // HEADS)

    # No grid: everything (inputs + stacked weights, < 100 KiB) is resident in
    # VMEM for a single kernel invocation; default whole-array blocks.
    out = pl.pallas_call(
        kernel,
        out_shape=jax.ShapeDtypeStruct((B * S, D), jnp.float32),
    )(x2, params["ln1w"], params["ln1b"], wqkv, bqkv,
      params["wo"], params["bo"], params["ln2w"], params["ln2b"],
      params["w1"], params["b1"], params["w2"], params["b2"])
    return out.reshape(B, S, D)


# ---------------- deterministic parameter init ----------------
def init_params(key):
    ks = jax.random.split(key, 12)
    def lin(k, din, dout):
        # stored as (in, out) so y = x @ W + b  (== x @ W_torch.T + b)
        return 0.02 * jax.random.normal(k, (LAYERS, din, dout), jnp.float32)
    def bias(k, dd):
        return 0.01 * jax.random.normal(k, (LAYERS, 1, dd), jnp.float32)
    return {
        "ln1w": jnp.ones((LAYERS, 1, HIDDEN), jnp.float32),
        "ln1b": jnp.zeros((LAYERS, 1, HIDDEN), jnp.float32),
        "wq": lin(ks[0], HIDDEN, HIDDEN), "bq": bias(ks[1], HIDDEN),
        "wk": lin(ks[2], HIDDEN, HIDDEN), "bk": bias(ks[3], HIDDEN),
        "wv": lin(ks[4], HIDDEN, HIDDEN), "bv": bias(ks[5], HIDDEN),
        "wo": lin(ks[6], HIDDEN, HIDDEN), "bo": bias(ks[7], HIDDEN),
        "ln2w": jnp.ones((LAYERS, 1, HIDDEN), jnp.float32),
        "ln2b": jnp.zeros((LAYERS, 1, HIDDEN), jnp.float32),
        "w1": lin(ks[8], HIDDEN, INTER), "b1": bias(ks[9], INTER),
        "w2": lin(ks[10], INTER, HIDDEN), "b2": bias(ks[11], HIDDEN),
    }


# ---------------- pure-JAX reference for validation ----------------
def reference(x, params):
    B, S, D = x.shape
    h = x.astype(jnp.float32)
    scale = HEAD_DIM ** (-0.5)
    for l in range(LAYERS):
        hn = _layernorm(h, params["ln1w"][l], params["ln1b"][l])
        q = hn @ params["wq"][l] + params["bq"][l]
        k = hn @ params["wk"][l] + params["bk"][l]
        v = hn @ params["wv"][l] + params["bv"][l]
        q = q.reshape(B, S, HEADS, HEAD_DIM).transpose(0, 2, 1, 3)
        k = k.reshape(B, S, HEADS, HEAD_DIM).transpose(0, 2, 1, 3)
        v = v.reshape(B, S, HEADS, HEAD_DIM).transpose(0, 2, 1, 3)
        s = jnp.einsum("bhqd,bhkd->bhqk", q, k) * scale
        p = jax.nn.softmax(s, axis=-1)
        o = jnp.einsum("bhqk,bhkd->bhqd", p, v)
        o = o.transpose(0, 2, 1, 3).reshape(B, S, D)
        o = o @ params["wo"][l] + params["bo"][l]
        h = h + o
        hn2 = _layernorm(h, params["ln2w"][l], params["ln2b"][l])
        m = _gelu_tanh(hn2 @ params["w1"][l] + params["b1"][l])
        m = m @ params["w2"][l] + params["b2"][l]
        h = h + m
    return h


if __name__ == "__main__":
    key = jax.random.PRNGKey(0)
    kx, kp = jax.random.split(key)
    x = jax.random.normal(kx, (BATCH, SEQ, HIDDEN), jnp.float32)
    params = init_params(kp)

    out = jax.block_until_ready(siglip_encoder(x, params))

    ref = reference(x, params)
    # slightly relaxed tolerance: softmax denominator uses the EUP approx reciprocal
    np.testing.assert_allclose(np.asarray(out), np.asarray(ref), rtol=2e-3, atol=2e-3)
    print("KERNEL_OK")
</pallas_src>

<mosaic_0001>
module attributes {stable_mosaic.version = 11 : i64} {
  func.func @encoder_kernel(%arg0: memref<16x32xf32, #tpu.memory_space<vmem>>, %arg1: memref<2x1x32xf32, #tpu.memory_space<vmem>>, %arg2: memref<2x1x32xf32, #tpu.memory_space<vmem>>, %arg3: memref<2x32x96xf32, #tpu.memory_space<vmem>>, %arg4: memref<2x1x96xf32, #tpu.memory_space<vmem>>, %arg5: memref<2x32x32xf32, #tpu.memory_space<vmem>>, %arg6: memref<2x1x32xf32, #tpu.memory_space<vmem>>, %arg7: memref<2x1x32xf32, #tpu.memory_space<vmem>>, %arg8: memref<2x1x32xf32, #tpu.memory_space<vmem>>, %arg9: memref<2x32x64xf32, #tpu.memory_space<vmem>>, %arg10: memref<2x1x64xf32, #tpu.memory_space<vmem>>, %arg11: memref<2x64x32xf32, #tpu.memory_space<vmem>>, %arg12: memref<2x1x32xf32, #tpu.memory_space<vmem>>, %arg13: memref<16x32xf32, #tpu.memory_space<vmem>>) attributes {dimension_semantics = [], scalar_prefetch = 0 : i64, scratch_operands = 0 : i64, tpu.core_type = #tpu.core_type<tc>} {
    %c0 = arith.constant 0 : index
    %c0_0 = arith.constant 0 : index
    %0 = vector.load %arg0[%c0, %c0_0] : memref<16x32xf32, #tpu.memory_space<vmem>>, vector<16x32xf32>
    %c0_1 = arith.constant 0 : index
    %c0_2 = arith.constant 0 : index
    %c0_3 = arith.constant 0 : index
    %1 = vector.load %arg1[%c0_1, %c0_2, %c0_3] : memref<2x1x32xf32, #tpu.memory_space<vmem>>, vector<1x1x32xf32>
    %2 = vector.shape_cast %1 : vector<1x1x32xf32> to vector<1x32xf32>
    %c0_4 = arith.constant 0 : index
    %c0_5 = arith.constant 0 : index
    %c0_6 = arith.constant 0 : index
    %3 = vector.load %arg2[%c0_4, %c0_5, %c0_6] : memref<2x1x32xf32, #tpu.memory_space<vmem>>, vector<1x1x32xf32>
    %4 = vector.shape_cast %3 : vector<1x1x32xf32> to vector<1x32xf32>
    %cst = arith.constant dense<0.000000e+00> : vector<16xf32>
    %5 = vector.multi_reduction <add>, %0, %cst [1] : vector<16x32xf32> to vector<16xf32>
    %6 = vector.shape_cast %5 : vector<16xf32> to vector<16x1xf32>
    %cst_7 = arith.constant 3.200000e+01 : f32
    %7 = vector.broadcast %cst_7 : f32 to vector<16x1xf32>
    %8 = arith.divf %6, %7 : vector<16x1xf32>
    %9 = vector.broadcast %8 : vector<16x1xf32> to vector<16x32xf32>
    %10 = arith.subf %0, %9 : vector<16x32xf32>
    %11 = arith.mulf %10, %10 : vector<16x32xf32>
    %cst_8 = arith.constant dense<0.000000e+00> : vector<16xf32>
    %12 = vector.multi_reduction <add>, %11, %cst_8 [1] : vector<16x32xf32> to vector<16xf32>
    %13 = vector.shape_cast %12 : vector<16xf32> to vector<16x1xf32>
    %cst_9 = arith.constant 3.200000e+01 : f32
    %14 = vector.broadcast %cst_9 : f32 to vector<16x1xf32>
    %15 = arith.divf %13, %14 : vector<16x1xf32>
    %16 = vector.broadcast %8 : vector<16x1xf32> to vector<16x32xf32>
    %17 = arith.subf %0, %16 : vector<16x32xf32>
    %cst_10 = arith.constant 9.99999997E-7 : f32
    %18 = vector.broadcast %cst_10 : f32 to vector<16x1xf32>
    %19 = arith.addf %15, %18 : vector<16x1xf32>
    %20 = math.rsqrt %19 : vector<16x1xf32>
    %21 = vector.broadcast %20 : vector<16x1xf32> to vector<16x32xf32>
    %22 = arith.mulf %17, %21 : vector<16x32xf32>
    %23 = vector.broadcast %2 : vector<1x32xf32> to vector<16x32xf32>
    %24 = arith.mulf %22, %23 : vector<16x32xf32>
    %25 = vector.broadcast %4 : vector<1x32xf32> to vector<16x32xf32>
    %26 = arith.addf %24, %25 : vector<16x32xf32>
    %c0_11 = arith.constant 0 : index
    %c0_12 = arith.constant 0 : index
    %c0_13 = arith.constant 0 : index
    %27 = vector.load %arg3[%c0_11, %c0_12, %c0_13] : memref<2x32x96xf32, #tpu.memory_space<vmem>>, vector<1x32x96xf32>
    %28 = vector.shape_cast %27 : vector<1x32x96xf32> to vector<32x96xf32>
    %cst_14 = arith.constant dense<0.000000e+00> : vector<16x96xf32>
    %29 = tpu.matmul %26, %28, %cst_14 {dimension_numbers = #tpu.dot_dimension_numbers<[1], [0], [0], [1], [0, 0, 1, 1], [], []>} : vector<16x32xf32>, vector<32x96xf32>, vector<16x96xf32> -> vector<16x96xf32>
    %c0_15 = arith.constant 0 : index
    %c0_16 = arith.constant 0 : index
    %c0_17 = arith.constant 0 : index
    %30 = vector.load %arg4[%c0_15, %c0_16, %c0_17] : memref<2x1x96xf32, #tpu.memory_space<vmem>>, vector<1x1x96xf32>
    %31 = vector.shape_cast %30 : vector<1x1x96xf32> to vector<1x96xf32>
    %32 = vector.broadcast %31 : vector<1x96xf32> to vector<16x96xf32>
    %33 = arith.addf %29, %32 : vector<16x96xf32>
    %c0_18 = arith.constant 0 : index
    %c0_19 = arith.constant 0 : index
    %c0_20 = arith.constant 0 : index
    %34 = vector.load %arg5[%c0_18, %c0_19, %c0_20] : memref<2x32x32xf32, #tpu.memory_space<vmem>>, vector<1x32x32xf32>
    %35 = vector.shape_cast %34 : vector<1x32x32xf32> to vector<32x32xf32>
    %36 = vector.extract_strided_slice %33 {offsets = [0, 0], sizes = [16, 8], strides = [1, 1]} : vector<16x96xf32> to vector<16x8xf32>
    %37 = vector.shape_cast %36 : vector<16x8xf32> to vector<2x8x8xf32>
    %38 = vector.extract_strided_slice %33 {offsets = [0, 32], sizes = [16, 8], strides = [1, 1]} : vector<16x96xf32> to vector<16x8xf32>
    %39 = vector.shape_cast %38 : vector<16x8xf32> to vector<2x8x8xf32>
    %40 = vector.extract_strided_slice %33 {offsets = [0, 64], sizes = [16, 8], strides = [1, 1]} : vector<16x96xf32> to vector<16x8xf32>
    %41 = vector.shape_cast %40 : vector<16x8xf32> to vector<2x8x8xf32>
    "tpu.trace_start"() <{level = 10 : i32, message = "bqd,bkd->bqk"}> : () -> ()
    %cst_21 = arith.constant dense<0.000000e+00> : vector<2x8x8xf32>
    %42 = tpu.matmul %37, %39, %cst_21 {dimension_numbers = #tpu.dot_dimension_numbers<[2], [2], [1], [1], [0, 0, 0, 1, 1, 1], [0], [0]>} : vector<2x8x8xf32>, vector<2x8x8xf32>, vector<2x8x8xf32> -> vector<2x8x8xf32>
    "tpu.trace_stop"() : () -> ()
    %cst_22 = arith.constant dense<0xFF800000> : vector<2x8xf32>
    %43 = vector.multi_reduction <maximumf>, %42, %cst_22 [2] : vector<2x8x8xf32> to vector<2x8xf32>
    %44 = vector.shape_cast %43 : vector<2x8xf32> to vector<2x8x1xf32>
    %45 = vector.broadcast %44 : vector<2x8x1xf32> to vector<2x8x8xf32>
    %46 = arith.subf %42, %45 : vector<2x8x8xf32>
    %47 = math.exp %46 : vector<2x8x8xf32>
    %cst_23 = arith.constant dense<0.000000e+00> : vector<2x8xf32>
    %48 = vector.multi_reduction <add>, %47, %cst_23 [2] : vector<2x8x8xf32> to vector<2x8xf32>
    %49 = vector.shape_cast %48 : vector<2x8xf32> to vector<2x8x1xf32>
    %50 = tpu.reciprocal %49 {approx = true} : vector<2x8x1xf32> -> vector<2x8x1xf32>
    %51 = vector.broadcast %50 : vector<2x8x1xf32> to vector<2x8x8xf32>
    %52 = arith.mulf %47, %51 : vector<2x8x8xf32>
    "tpu.trace_start"() <{level = 10 : i32, message = "bqk,bkd->bqd"}> : () -> ()
    %cst_24 = arith.constant dense<0.000000e+00> : vector<2x8x8xf32>
    %53 = tpu.matmul %52, %41, %cst_24 {dimension_numbers = #tpu.dot_dimension_numbers<[2], [1], [1], [2], [0, 0, 0, 1, 1, 2], [0], [0]>} : vector<2x8x8xf32>, vector<2x8x8xf32>, vector<2x8x8xf32> -> vector<2x8x8xf32>
    "tpu.trace_stop"() : () -> ()
    %54 = vector.shape_cast %53 : vector<2x8x8xf32> to vector<16x8xf32>
    %55 = vector.extract_strided_slice %35 {offsets = [0, 0], sizes = [8, 32], strides = [1, 1]} : vector<32x32xf32> to vector<8x32xf32>
    %cst_25 = arith.constant dense<0.000000e+00> : vector<16x32xf32>
    %56 = tpu.matmul %54, %55, %cst_25 {dimension_numbers = #tpu.dot_dimension_numbers<[1], [0], [0], [1], [0, 0, 1, 1], [], []>} : vector<16x8xf32>, vector<8x32xf32>, vector<16x32xf32> -> vector<16x32xf32>
    %57 = vector.extract_strided_slice %33 {offsets = [0, 8], sizes = [16, 8], strides = [1, 1]} : vector<16x96xf32> to vector<16x8xf32>
    %58 = vector.shape_cast %57 : vector<16x8xf32> to vector<2x8x8xf32>
    %59 = vector.extract_strided_slice %33 {offsets = [0, 40], sizes = [16, 8], strides = [1, 1]} : vector<16x96xf32> to vector<16x8xf32>
    %60 = vector.shape_cast %59 : vector<16x8xf32> to vector<2x8x8xf32>
    %61 = vector.extract_strided_slice %33 {offsets = [0, 72], sizes = [16, 8], strides = [1, 1]} : vector<16x96xf32> to vector<16x8xf32>
    %62 = vector.shape_cast %61 : vector<16x8xf32> to vector<2x8x8xf32>
    "tpu.trace_start"() <{level = 10 : i32, message = "bqd,bkd->bqk"}> : () -> ()
    %cst_26 = arith.constant dense<0.000000e+00> : vector<2x8x8xf32>
    %63 = tpu.matmul %58, %60, %cst_26 {dimension_numbers = #tpu.dot_dimension_numbers<[2], [2], [1], [1], [0, 0, 0, 1, 1, 1], [0], [0]>} : vector<2x8x8xf32>, vector<2x8x8xf32>, vector<2x8x8xf32> -> vector<2x8x8xf32>
    "tpu.trace_stop"() : () -> ()
    %cst_27 = arith.constant dense<0xFF800000> : vector<2x8xf32>
    %64 = vector.multi_reduction <maximumf>, %63, %cst_27 [2] : vector<2x8x8xf32> to vector<2x8xf32>
    %65 = vector.shape_cast %64 : vector<2x8xf32> to vector<2x8x1xf32>
    %66 = vector.broadcast %65 : vector<2x8x1xf32> to vector<2x8x8xf32>
    %67 = arith.subf %63, %66 : vector<2x8x8xf32>
    %68 = math.exp %67 : vector<2x8x8xf32>
    %cst_28 = arith.constant dense<0.000000e+00> : vector<2x8xf32>
    %69 = vector.multi_reduction <add>, %68, %cst_28 [2] : vector<2x8x8xf32> to vector<2x8xf32>
    %70 = vector.shape_cast %69 : vector<2x8xf32> to vector<2x8x1xf32>
    %71 = tpu.reciprocal %70 {approx = true} : vector<2x8x1xf32> -> vector<2x8x1xf32>
    %72 = vector.broadcast %71 : vector<2x8x1xf32> to vector<2x8x8xf32>
    %73 = arith.mulf %68, %72 : vector<2x8x8xf32>
    "tpu.trace_start"() <{level = 10 : i32, message = "bqk,bkd->bqd"}> : () -> ()
    %cst_29 = arith.constant dense<0.000000e+00> : vector<2x8x8xf32>
    %74 = tpu.matmul %73, %62, %cst_29 {dimension_numbers = #tpu.dot_dimension_numbers<[2], [1], [1], [2], [0, 0, 0, 1, 1, 2], [0], [0]>} : vector<2x8x8xf32>, vector<2x8x8xf32>, vector<2x8x8xf32> -> vector<2x8x8xf32>
    "tpu.trace_stop"() : () -> ()
    %75 = vector.shape_cast %74 : vector<2x8x8xf32> to vector<16x8xf32>
    %76 = vector.extract_strided_slice %35 {offsets = [8, 0], sizes = [8, 32], strides = [1, 1]} : vector<32x32xf32> to vector<8x32xf32>
    %cst_30 = arith.constant dense<0.000000e+00> : vector<16x32xf32>
    %77 = tpu.matmul %75, %76, %cst_30 {dimension_numbers = #tpu.dot_dimension_numbers<[1], [0], [0], [1], [0, 0, 1, 1], [], []>} : vector<16x8xf32>, vector<8x32xf32>, vector<16x32xf32> -> vector<16x32xf32>
    %78 = arith.addf %56, %77 : vector<16x32xf32>
    %79 = vector.extract_strided_slice %33 {offsets = [0, 16], sizes = [16, 8], strides = [1, 1]} : vector<16x96xf32> to vector<16x8xf32>
    %80 = vector.shape_cast %79 : vector<16x8xf32> to vector<2x8x8xf32>
    %81 = vector.extract_strided_slice %33 {offsets = [0, 48], sizes = [16, 8], strides = [1, 1]} : vector<16x96xf32> to vector<16x8xf32>
    %82 = vector.shape_cast %81 : vector<16x8xf32> to vector<2x8x8xf32>
    %83 = vector.extract_strided_slice %33 {offsets = [0, 80], sizes = [16, 8], strides = [1, 1]} : vector<16x96xf32> to vector<16x8xf32>
    %84 = vector.shape_cast %83 : vector<16x8xf32> to vector<2x8x8xf32>
    "tpu.trace_start"() <{level = 10 : i32, message = "bqd,bkd->bqk"}> : () -> ()
    %cst_31 = arith.constant dense<0.000000e+00> : vector<2x8x8xf32>
    %85 = tpu.matmul %80, %82, %cst_31 {dimension_numbers = #tpu.dot_dimension_numbers<[2], [2], [1], [1], [0, 0, 0, 1, 1, 1], [0], [0]>} : vector<2x8x8xf32>, vector<2x8x8xf32>, vector<2x8x8xf32> -> vector<2x8x8xf32>
    "tpu.trace_stop"() : () -> ()
    %cst_32 = arith.constant dense<0xFF800000> : vector<2x8xf32>
    %86 = vector.multi_reduction <maximumf>, %85, %cst_32 [2] : vector<2x8x8xf32> to vector<2x8xf32>
    %87 = vector.shape_cast %86 : vector<2x8xf32> to vector<2x8x1xf32>
    %88 = vector.broadcast %87 : vector<2x8x1xf32> to vector<2x8x8xf32>
    %89 = arith.subf %85, %88 : vector<2x8x8xf32>
    %90 = math.exp %89 : vector<2x8x8xf32>
    %cst_33 = arith.constant dense<0.000000e+00> : vector<2x8xf32>
    %91 = vector.multi_reduction <add>, %90, %cst_33 [2] : vector<2x8x8xf32> to vector<2x8xf32>
    %92 = vector.shape_cast %91 : vector<2x8xf32> to vector<2x8x1xf32>
    %93 = tpu.reciprocal %92 {approx = true} : vector<2x8x1xf32> -> vector<2x8x1xf32>
    %94 = vector.broadcast %93 : vector<2x8x1xf32> to vector<2x8x8xf32>
    %95 = arith.mulf %90, %94 : vector<2x8x8xf32>
    "tpu.trace_start"() <{level = 10 : i32, message = "bqk,bkd->bqd"}> : () -> ()
    %cst_34 = arith.constant dense<0.000000e+00> : vector<2x8x8xf32>
    %96 = tpu.matmul %95, %84, %cst_34 {dimension_numbers = #tpu.dot_dimension_numbers<[2], [1], [1], [2], [0, 0, 0, 1, 1, 2], [0], [0]>} : vector<2x8x8xf32>, vector<2x8x8xf32>, vector<2x8x8xf32> -> vector<2x8x8xf32>
    "tpu.trace_stop"() : () -> ()
    %97 = vector.shape_cast %96 : vector<2x8x8xf32> to vector<16x8xf32>
    %98 = vector.extract_strided_slice %35 {offsets = [16, 0], sizes = [8, 32], strides = [1, 1]} : vector<32x32xf32> to vector<8x32xf32>
    %cst_35 = arith.constant dense<0.000000e+00> : vector<16x32xf32>
    %99 = tpu.matmul %97, %98, %cst_35 {dimension_numbers = #tpu.dot_dimension_numbers<[1], [0], [0], [1], [0, 0, 1, 1], [], []>} : vector<16x8xf32>, vector<8x32xf32>, vector<16x32xf32> -> vector<16x32xf32>
    %100 = arith.addf %78, %99 : vector<16x32xf32>
    %101 = vector.extract_strided_slice %33 {offsets = [0, 24], sizes = [16, 8], strides = [1, 1]} : vector<16x96xf32> to vector<16x8xf32>
    %102 = vector.shape_cast %101 : vector<16x8xf32> to vector<2x8x8xf32>
    %103 = vector.extract_strided_slice %33 {offsets = [0, 56], sizes = [16, 8], strides = [1, 1]} : vector<16x96xf32> to vector<16x8xf32>
    %104 = vector.shape_cast %103 : vector<16x8xf32> to vector<2x8x8xf32>
    %105 = vector.extract_strided_slice %33 {offsets = [0, 88], sizes = [16, 8], strides = [1, 1]} : vector<16x96xf32> to vector<16x8xf32>
    %106 = vector.shape_cast %105 : vector<16x8xf32> to vector<2x8x8xf32>
    "tpu.trace_start"() <{level = 10 : i32, message = "bqd,bkd->bqk"}> : () -> ()
    %cst_36 = arith.constant dense<0.000000e+00> : vector<2x8x8xf32>
    %107 = tpu.matmul %102, %104, %cst_36 {dimension_numbers = #tpu.dot_dimension_numbers<[2], [2], [1], [1], [0, 0, 0, 1, 1, 1], [0], [0]>} : vector<2x8x8xf32>, vector<2x8x8xf32>, vector<2x8x8xf32> -> vector<2x8x8xf32>
    "tpu.trace_stop"() : () -> ()
    %cst_37 = arith.constant dense<0xFF800000> : vector<2x8xf32>
    %108 = vector.multi_reduction <maximumf>, %107, %cst_37 [2] : vector<2x8x8xf32> to vector<2x8xf32>
    %109 = vector.shape_cast %108 : vector<2x8xf32> to vector<2x8x1xf32>
    %110 = vector.broadcast %109 : vector<2x8x1xf32> to vector<2x8x8xf32>
    %111 = arith.subf %107, %110 : vector<2x8x8xf32>
    %112 = math.exp %111 : vector<2x8x8xf32>
    %cst_38 = arith.constant dense<0.000000e+00> : vector<2x8xf32>
    %113 = vector.multi_reduction <add>, %112, %cst_38 [2] : vector<2x8x8xf32> to vector<2x8xf32>
    %114 = vector.shape_cast %113 : vector<2x8xf32> to vector<2x8x1xf32>
    %115 = tpu.reciprocal %114 {approx = true} : vector<2x8x1xf32> -> vector<2x8x1xf32>
    %116 = vector.broadcast %115 : vector<2x8x1xf32> to vector<2x8x8xf32>
    %117 = arith.mulf %112, %116 : vector<2x8x8xf32>
    "tpu.trace_start"() <{level = 10 : i32, message = "bqk,bkd->bqd"}> : () -> ()
    %cst_39 = arith.constant dense<0.000000e+00> : vector<2x8x8xf32>
    %118 = tpu.matmul %117, %106, %cst_39 {dimension_numbers = #tpu.dot_dimension_numbers<[2], [1], [1], [2], [0, 0, 0, 1, 1, 2], [0], [0]>} : vector<2x8x8xf32>, vector<2x8x8xf32>, vector<2x8x8xf32> -> vector<2x8x8xf32>
    "tpu.trace_stop"() : () -> ()
    %119 = vector.shape_cast %118 : vector<2x8x8xf32> to vector<16x8xf32>
    %120 = vector.extract_strided_slice %35 {offsets = [24, 0], sizes = [8, 32], strides = [1, 1]} : vector<32x32xf32> to vector<8x32xf32>
    %cst_40 = arith.constant dense<0.000000e+00> : vector<16x32xf32>
    %121 = tpu.matmul %119, %120, %cst_40 {dimension_numbers = #tpu.dot_dimension_numbers<[1], [0], [0], [1], [0, 0, 1, 1], [], []>} : vector<16x8xf32>, vector<8x32xf32>, vector<16x32xf32> -> vector<16x32xf32>
    %122 = arith.addf %100, %121 : vector<16x32xf32>
    %123 = arith.addf %0, %122 : vector<16x32xf32>
    %c0_41 = arith.constant 0 : index
    %c0_42 = arith.constant 0 : index
    %c0_43 = arith.constant 0 : index
    %124 = vector.load %arg6[%c0_41, %c0_42, %c0_43] : memref<2x1x32xf32, #tpu.memory_space<vmem>>, vector<1x1x32xf32>
    %125 = vector.shape_cast %124 : vector<1x1x32xf32> to vector<1x32xf32>
    %126 = vector.broadcast %125 : vector<1x32xf32> to vector<16x32xf32>
    %127 = arith.addf %123, %126 : vector<16x32xf32>
    %c0_44 = arith.constant 0 : index
    %c0_45 = arith.constant 0 : index
    %c0_46 = arith.constant 0 : index
    %128 = vector.load %arg7[%c0_44, %c0_45, %c0_46] : memref<2x1x32xf32, #tpu.memory_space<vmem>>, vector<1x1x32xf32>
    %129 = vector.shape_cast %128 : vector<1x1x32xf32> to vector<1x32xf32>
    %c0_47 = arith.constant 0 : index
    %c0_48 = arith.constant 0 : index
    %c0_49 = arith.constant 0 : index
    %130 = vector.load %arg8[%c0_47, %c0_48, %c0_49] : memref<2x1x32xf32, #tpu.memory_space<vmem>>, vector<1x1x32xf32>
    %131 = vector.shape_cast %130 : vector<1x1x32xf32> to vector<1x32xf32>
    %cst_50 = arith.constant dense<0.000000e+00> : vector<16xf32>
    %132 = vector.multi_reduction <add>, %127, %cst_50 [1] : vector<16x32xf32> to vector<16xf32>
    %133 = vector.shape_cast %132 : vector<16xf32> to vector<16x1xf32>
    %cst_51 = arith.constant 3.200000e+01 : f32
    %134 = vector.broadcast %cst_51 : f32 to vector<16x1xf32>
    %135 = arith.divf %133, %134 : vector<16x1xf32>
    %136 = vector.broadcast %135 : vector<16x1xf32> to vector<16x32xf32>
    %137 = arith.subf %127, %136 : vector<16x32xf32>
    %138 = arith.mulf %137, %137 : vector<16x32xf32>
    %cst_52 = arith.constant dense<0.000000e+00> : vector<16xf32>
    %139 = vector.multi_reduction <add>, %138, %cst_52 [1] : vector<16x32xf32> to vector<16xf32>
    %140 = vector.shape_cast %139 : vector<16xf32> to vector<16x1xf32>
    %cst_53 = arith.constant 3.200000e+01 : f32
    %141 = vector.broadcast %cst_53 : f32 to vector<16x1xf32>
    %142 = arith.divf %140, %141 : vector<16x1xf32>
    %143 = vector.broadcast %135 : vector<16x1xf32> to vector<16x32xf32>
    %144 = arith.subf %127, %143 : vector<16x32xf32>
    %cst_54 = arith.constant 9.99999997E-7 : f32
    %145 = vector.broadcast %cst_54 : f32 to vector<16x1xf32>
    %146 = arith.addf %142, %145 : vector<16x1xf32>
    %147 = math.rsqrt %146 : vector<16x1xf32>
    %148 = vector.broadcast %147 : vector<16x1xf32> to vector<16x32xf32>
    %149 = arith.mulf %144, %148 : vector<16x32xf32>
    %150 = vector.broadcast %129 : vector<1x32xf32> to vector<16x32xf32>
    %151 = arith.mulf %149, %150 : vector<16x32xf32>
    %152 = vector.broadcast %131 : vector<1x32xf32> to vector<16x32xf32>
    %153 = arith.addf %151, %152 : vector<16x32xf32>
    %c0_55 = arith.constant 0 : index
    %c0_56 = arith.constant 0 : index
    %c0_57 = arith.constant 0 : index
    %154 = vector.load %arg9[%c0_55, %c0_56, %c0_57] : memref<2x32x64xf32, #tpu.memory_space<vmem>>, vector<1x32x64xf32>
    %155 = vector.shape_cast %154 : vector<1x32x64xf32> to vector<32x64xf32>
    %cst_58 = arith.constant dense<0.000000e+00> : vector<16x64xf32>
    %156 = tpu.matmul %153, %155, %cst_58 {dimension_numbers = #tpu.dot_dimension_numbers<[1], [0], [0], [1], [0, 0, 1, 1], [], []>} : vector<16x32xf32>, vector<32x64xf32>, vector<16x64xf32> -> vector<16x64xf32>
    %c0_59 = arith.constant 0 : index
    %c0_60 = arith.constant 0 : index
    %c0_61 = arith.constant 0 : index
    %157 = vector.load %arg10[%c0_59, %c0_60, %c0_61] : memref<2x1x64xf32, #tpu.memory_space<vmem>>, vector<1x1x64xf32>
    %158 = vector.shape_cast %157 : vector<1x1x64xf32> to vector<1x64xf32>
    %159 = vector.broadcast %158 : vector<1x64xf32> to vector<16x64xf32>
    %160 = arith.addf %156, %159 : vector<16x64xf32>
    %cst_62 = arith.constant 5.000000e-01 : f32
    %161 = vector.broadcast %cst_62 : f32 to vector<16x64xf32>
    %162 = arith.mulf %161, %160 : vector<16x64xf32>
    %cst_63 = arith.constant 4.471500e-02 : f32
    %163 = vector.broadcast %cst_63 : f32 to vector<16x64xf32>
    %164 = arith.mulf %163, %160 : vector<16x64xf32>
    %165 = arith.mulf %164, %160 : vector<16x64xf32>
    %166 = arith.mulf %165, %160 : vector<16x64xf32>
    %167 = arith.addf %160, %166 : vector<16x64xf32>
    %cst_64 = arith.constant 0.797884583 : f32
    %168 = vector.broadcast %cst_64 : f32 to vector<16x64xf32>
    %169 = arith.mulf %168, %167 : vector<16x64xf32>
    %170 = math.tanh %169 : vector<16x64xf32>
    %cst_65 = arith.constant 1.000000e+00 : f32
    %171 = vector.broadcast %cst_65 : f32 to vector<16x64xf32>
    %172 = arith.addf %171, %170 : vector<16x64xf32>
    %173 = arith.mulf %162, %172 : vector<16x64xf32>
    %c0_66 = arith.constant 0 : index
    %c0_67 = arith.constant 0 : index
    %c0_68 = arith.constant 0 : index
    %174 = vector.load %arg11[%c0_66, %c0_67, %c0_68] : memref<2x64x32xf32, #tpu.memory_space<vmem>>, vector<1x64x32xf32>
    %175 = vector.shape_cast %174 : vector<1x64x32xf32> to vector<64x32xf32>
    %cst_69 = arith.constant dense<0.000000e+00> : vector<16x32xf32>
    %176 = tpu.matmul %173, %175, %cst_69 {dimension_numbers = #tpu.dot_dimension_numbers<[1], [0], [0], [1], [0, 0, 1, 1], [], []>} : vector<16x64xf32>, vector<64x32xf32>, vector<16x32xf32> -> vector<16x32xf32>
    %c0_70 = arith.constant 0 : index
    %c0_71 = arith.constant 0 : index
    %c0_72 = arith.constant 0 : index
    %177 = vector.load %arg12[%c0_70, %c0_71, %c0_72] : memref<2x1x32xf32, #tpu.memory_space<vmem>>, vector<1x1x32xf32>
    %178 = vector.shape_cast %177 : vector<1x1x32xf32> to vector<1x32xf32>
    %179 = vector.broadcast %178 : vector<1x32xf32> to vector<16x32xf32>
    %180 = arith.addf %176, %179 : vector<16x32xf32>
    %181 = arith.addf %127, %180 : vector<16x32xf32>
    %c1 = arith.constant 1 : index
    %c0_73 = arith.constant 0 : index
    %c0_74 = arith.constant 0 : index
    %182 = vector.load %arg1[%c1, %c0_73, %c0_74] : memref<2x1x32xf32, #tpu.memory_space<vmem>>, vector<1x1x32xf32>
    %183 = vector.shape_cast %182 : vector<1x1x32xf32> to vector<1x32xf32>
    %c1_75 = arith.constant 1 : index
    %c0_76 = arith.constant 0 : index
    %c0_77 = arith.constant 0 : index
    %184 = vector.load %arg2[%c1_75, %c0_76, %c0_77] : memref<2x1x32xf32, #tpu.memory_space<vmem>>, vector<1x1x32xf32>
    %185 = vector.shape_cast %184 : vector<1x1x32xf32> to vector<1x32xf32>
    %cst_78 = arith.constant dense<0.000000e+00> : vector<16xf32>
    %186 = vector.multi_reduction <add>, %181, %cst_78 [1] : vector<16x32xf32> to vector<16xf32>
    %187 = vector.shape_cast %186 : vector<16xf32> to vector<16x1xf32>
    %cst_79 = arith.constant 3.200000e+01 : f32
    %188 = vector.broadcast %cst_79 : f32 to vector<16x1xf32>
    %189 = arith.divf %187, %188 : vector<16x1xf32>
    %190 = vector.broadcast %189 : vector<16x1xf32> to vector<16x32xf32>
    %191 = arith.subf %181, %190 : vector<16x32xf32>
    %192 = arith.mulf %191, %191 : vector<16x32xf32>
    %cst_80 = arith.constant dense<0.000000e+00> : vector<16xf32>
    %193 = vector.multi_reduction <add>, %192, %cst_80 [1] : vector<16x32xf32> to vector<16xf32>
    %194 = vector.shape_cast %193 : vector<16xf32> to vector<16x1xf32>
    %cst_81 = arith.constant 3.200000e+01 : f32
    %195 = vector.broadcast %cst_81 : f32 to vector<16x1xf32>
    %196 = arith.divf %194, %195 : vector<16x1xf32>
    %197 = vector.broadcast %189 : vector<16x1xf32> to vector<16x32xf32>
    %198 = arith.subf %181, %197 : vector<16x32xf32>
    %cst_82 = arith.constant 9.99999997E-7 : f32
    %199 = vector.broadcast %cst_82 : f32 to vector<16x1xf32>
    %200 = arith.addf %196, %199 : vector<16x1xf32>
    %201 = math.rsqrt %200 : vector<16x1xf32>
    %202 = vector.broadcast %201 : vector<16x1xf32> to vector<16x32xf32>
    %203 = arith.mulf %198, %202 : vector<16x32xf32>
    %204 = vector.broadcast %183 : vector<1x32xf32> to vector<16x32xf32>
    %205 = arith.mulf %203, %204 : vector<16x32xf32>
    %206 = vector.broadcast %185 : vector<1x32xf32> to vector<16x32xf32>
    %207 = arith.addf %205, %206 : vector<16x32xf32>
    %c1_83 = arith.constant 1 : index
    %c0_84 = arith.constant 0 : index
    %c0_85 = arith.constant 0 : index
    %208 = vector.load %arg3[%c1_83, %c0_84, %c0_85] : memref<2x32x96xf32, #tpu.memory_space<vmem>>, vector<1x32x96xf32>
    %209 = vector.shape_cast %208 : vector<1x32x96xf32> to vector<32x96xf32>
    %cst_86 = arith.constant dense<0.000000e+00> : vector<16x96xf32>
    %210 = tpu.matmul %207, %209, %cst_86 {dimension_numbers = #tpu.dot_dimension_numbers<[1], [0], [0], [1], [0, 0, 1, 1], [], []>} : vector<16x32xf32>, vector<32x96xf32>, vector<16x96xf32> -> vector<16x96xf32>
    %c1_87 = arith.constant 1 : index
    %c0_88 = arith.constant 0 : index
    %c0_89 = arith.constant 0 : index
    %211 = vector.load %arg4[%c1_87, %c0_88, %c0_89] : memref<2x1x96xf32, #tpu.memory_space<vmem>>, vector<1x1x96xf32>
    %212 = vector.shape_cast %211 : vector<1x1x96xf32> to vector<1x96xf32>
    %213 = vector.broadcast %212 : vector<1x96xf32> to vector<16x96xf32>
    %214 = arith.addf %210, %213 : vector<16x96xf32>
    %c1_90 = arith.constant 1 : index
    %c0_91 = arith.constant 0 : index
    %c0_92 = arith.constant 0 : index
    %215 = vector.load %arg5[%c1_90, %c0_91, %c0_92] : memref<2x32x32xf32, #tpu.memory_space<vmem>>, vector<1x32x32xf32>
    %216 = vector.shape_cast %215 : vector<1x32x32xf32> to vector<32x32xf32>
    %217 = vector.extract_strided_slice %214 {offsets = [0, 0], sizes = [16, 8], strides = [1, 1]} : vector<16x96xf32> to vector<16x8xf32>
    %218 = vector.shape_cast %217 : vector<16x8xf32> to vector<2x8x8xf32>
    %219 = vector.extract_strided_slice %214 {offsets = [0, 32], sizes = [16, 8], strides = [1, 1]} : vector<16x96xf32> to vector<16x8xf32>
    %220 = vector.shape_cast %219 : vector<16x8xf32> to vector<2x8x8xf32>
    %221 = vector.extract_strided_slice %214 {offsets = [0, 64], sizes = [16, 8], strides = [1, 1]} : vector<16x96xf32> to vector<16x8xf32>
    %222 = vector.shape_cast %221 : vector<16x8xf32> to vector<2x8x8xf32>
    "tpu.trace_start"() <{level = 10 : i32, message = "bqd,bkd->bqk"}> : () -> ()
    %cst_93 = arith.constant dense<0.000000e+00> : vector<2x8x8xf32>
    %223 = tpu.matmul %218, %220, %cst_93 {dimension_numbers = #tpu.dot_dimension_numbers<[2], [2], [1], [1], [0, 0, 0, 1, 1, 1], [0], [0]>} : vector<2x8x8xf32>, vector<2x8x8xf32>, vector<2x8x8xf32> -> vector<2x8x8xf32>
    "tpu.trace_stop"() : () -> ()
    %cst_94 = arith.constant dense<0xFF800000> : vector<2x8xf32>
    %224 = vector.multi_reduction <maximumf>, %223, %cst_94 [2] : vector<2x8x8xf32> to vector<2x8xf32>
    %225 = vector.shape_cast %224 : vector<2x8xf32> to vector<2x8x1xf32>
    %226 = vector.broadcast %225 : vector<2x8x1xf32> to vector<2x8x8xf32>
    %227 = arith.subf %223, %226 : vector<2x8x8xf32>
    %228 = math.exp %227 : vector<2x8x8xf32>
    %cst_95 = arith.constant dense<0.000000e+00> : vector<2x8xf32>
    %229 = vector.multi_reduction <add>, %228, %cst_95 [2] : vector<2x8x8xf32> to vector<2x8xf32>
    %230 = vector.shape_cast %229 : vector<2x8xf32> to vector<2x8x1xf32>
    %231 = tpu.reciprocal %230 {approx = true} : vector<2x8x1xf32> -> vector<2x8x1xf32>
    %232 = vector.broadcast %231 : vector<2x8x1xf32> to vector<2x8x8xf32>
    %233 = arith.mulf %228, %232 : vector<2x8x8xf32>
    "tpu.trace_start"() <{level = 10 : i32, message = "bqk,bkd->bqd"}> : () -> ()
    %cst_96 = arith.constant dense<0.000000e+00> : vector<2x8x8xf32>
    %234 = tpu.matmul %233, %222, %cst_96 {dimension_numbers = #tpu.dot_dimension_numbers<[2], [1], [1], [2], [0, 0, 0, 1, 1, 2], [0], [0]>} : vector<2x8x8xf32>, vector<2x8x8xf32>, vector<2x8x8xf32> -> vector<2x8x8xf32>
    "tpu.trace_stop"() : () -> ()
    %235 = vector.shape_cast %234 : vector<2x8x8xf32> to vector<16x8xf32>
    %236 = vector.extract_strided_slice %216 {offsets = [0, 0], sizes = [8, 32], strides = [1, 1]} : vector<32x32xf32> to vector<8x32xf32>
    %cst_97 = arith.constant dense<0.000000e+00> : vector<16x32xf32>
    %237 = tpu.matmul %235, %236, %cst_97 {dimension_numbers = #tpu.dot_dimension_numbers<[1], [0], [0], [1], [0, 0, 1, 1], [], []>} : vector<16x8xf32>, vector<8x32xf32>, vector<16x32xf32> -> vector<16x32xf32>
    %238 = vector.extract_strided_slice %214 {offsets = [0, 8], sizes = [16, 8], strides = [1, 1]} : vector<16x96xf32> to vector<16x8xf32>
    %239 = vector.shape_cast %238 : vector<16x8xf32> to vector<2x8x8xf32>
    %240 = vector.extract_strided_slice %214 {offsets = [0, 40], sizes = [16, 8], strides = [1, 1]} : vector<16x96xf32> to vector<16x8xf32>
    %241 = vector.shape_cast %240 : vector<16x8xf32> to vector<2x8x8xf32>
    %242 = vector.extract_strided_slice %214 {offsets = [0, 72], sizes = [16, 8], strides = [1, 1]} : vector<16x96xf32> to vector<16x8xf32>
    %243 = vector.shape_cast %242 : vector<16x8xf32> to vector<2x8x8xf32>
    "tpu.trace_start"() <{level = 10 : i32, message = "bqd,bkd->bqk"}> : () -> ()
    %cst_98 = arith.constant dense<0.000000e+00> : vector<2x8x8xf32>
    %244 = tpu.matmul %239, %241, %cst_98 {dimension_numbers = #tpu.dot_dimension_numbers<[2], [2], [1], [1], [0, 0, 0, 1, 1, 1], [0], [0]>} : vector<2x8x8xf32>, vector<2x8x8xf32>, vector<2x8x8xf32> -> vector<2x8x8xf32>
    "tpu.trace_stop"() : () -> ()
    %cst_99 = arith.constant dense<0xFF800000> : vector<2x8xf32>
    %245 = vector.multi_reduction <maximumf>, %244, %cst_99 [2] : vector<2x8x8xf32> to vector<2x8xf32>
    %246 = vector.shape_cast %245 : vector<2x8xf32> to vector<2x8x1xf32>
    %247 = vector.broadcast %246 : vector<2x8x1xf32> to vector<2x8x8xf32>
    %248 = arith.subf %244, %247 : vector<2x8x8xf32>
    %249 = math.exp %248 : vector<2x8x8xf32>
    %cst_100 = arith.constant dense<0.000000e+00> : vector<2x8xf32>
    %250 = vector.multi_reduction <add>, %249, %cst_100 [2] : vector<2x8x8xf32> to vector<2x8xf32>
    %251 = vector.shape_cast %250 : vector<2x8xf32> to vector<2x8x1xf32>
    %252 = tpu.reciprocal %251 {approx = true} : vector<2x8x1xf32> -> vector<2x8x1xf32>
    %253 = vector.broadcast %252 : vector<2x8x1xf32> to vector<2x8x8xf32>
    %254 = arith.mulf %249, %253 : vector<2x8x8xf32>
    "tpu.trace_start"() <{level = 10 : i32, message = "bqk,bkd->bqd"}> : () -> ()
    %cst_101 = arith.constant dense<0.000000e+00> : vector<2x8x8xf32>
    %255 = tpu.matmul %254, %243, %cst_101 {dimension_numbers = #tpu.dot_dimension_numbers<[2], [1], [1], [2], [0, 0, 0, 1, 1, 2], [0], [0]>} : vector<2x8x8xf32>, vector<2x8x8xf32>, vector<2x8x8xf32> -> vector<2x8x8xf32>
    "tpu.trace_stop"() : () -> ()
    %256 = vector.shape_cast %255 : vector<2x8x8xf32> to vector<16x8xf32>
    %257 = vector.extract_strided_slice %216 {offsets = [8, 0], sizes = [8, 32], strides = [1, 1]} : vector<32x32xf32> to vector<8x32xf32>
    %cst_102 = arith.constant dense<0.000000e+00> : vector<16x32xf32>
    %258 = tpu.matmul %256, %257, %cst_102 {dimension_numbers = #tpu.dot_dimension_numbers<[1], [0], [0], [1], [0, 0, 1, 1], [], []>} : vector<16x8xf32>, vector<8x32xf32>, vector<16x32xf32> -> vector<16x32xf32>
    %259 = arith.addf %237, %258 : vector<16x32xf32>
    %260 = vector.extract_strided_slice %214 {offsets = [0, 16], sizes = [16, 8], strides = [1, 1]} : vector<16x96xf32> to vector<16x8xf32>
    %261 = vector.shape_cast %260 : vector<16x8xf32> to vector<2x8x8xf32>
    %262 = vector.extract_strided_slice %214 {offsets = [0, 48], sizes = [16, 8], strides = [1, 1]} : vector<16x96xf32> to vector<16x8xf32>
    %263 = vector.shape_cast %262 : vector<16x8xf32> to vector<2x8x8xf32>
    %264 = vector.extract_strided_slice %214 {offsets = [0, 80], sizes = [16, 8], strides = [1, 1]} : vector<16x96xf32> to vector<16x8xf32>
    %265 = vector.shape_cast %264 : vector<16x8xf32> to vector<2x8x8xf32>
    "tpu.trace_start"() <{level = 10 : i32, message = "bqd,bkd->bqk"}> : () -> ()
    %cst_103 = arith.constant dense<0.000000e+00> : vector<2x8x8xf32>
    %266 = tpu.matmul %261, %263, %cst_103 {dimension_numbers = #tpu.dot_dimension_numbers<[2], [2], [1], [1], [0, 0, 0, 1, 1, 1], [0], [0]>} : vector<2x8x8xf32>, vector<2x8x8xf32>, vector<2x8x8xf32> -> vector<2x8x8xf32>
    "tpu.trace_stop"() : () -> ()
    %cst_104 = arith.constant dense<0xFF800000> : vector<2x8xf32>
    %267 = vector.multi_reduction <maximumf>, %266, %cst_104 [2] : vector<2x8x8xf32> to vector<2x8xf32>
    %268 = vector.shape_cast %267 : vector<2x8xf32> to vector<2x8x1xf32>
    %269 = vector.broadcast %268 : vector<2x8x1xf32> to vector<2x8x8xf32>
    %270 = arith.subf %266, %269 : vector<2x8x8xf32>
    %271 = math.exp %270 : vector<2x8x8xf32>
    %cst_105 = arith.constant dense<0.000000e+00> : vector<2x8xf32>
    %272 = vector.multi_reduction <add>, %271, %cst_105 [2] : vector<2x8x8xf32> to vector<2x8xf32>
    %273 = vector.shape_cast %272 : vector<2x8xf32> to vector<2x8x1xf32>
    %274 = tpu.reciprocal %273 {approx = true} : vector<2x8x1xf32> -> vector<2x8x1xf32>
    %275 = vector.broadcast %274 : vector<2x8x1xf32> to vector<2x8x8xf32>
    %276 = arith.mulf %271, %275 : vector<2x8x8xf32>
    "tpu.trace_start"() <{level = 10 : i32, message = "bqk,bkd->bqd"}> : () -> ()
    %cst_106 = arith.constant dense<0.000000e+00> : vector<2x8x8xf32>
    %277 = tpu.matmul %276, %265, %cst_106 {dimension_numbers = #tpu.dot_dimension_numbers<[2], [1], [1], [2], [0, 0, 0, 1, 1, 2], [0], [0]>} : vector<2x8x8xf32>, vector<2x8x8xf32>, vector<2x8x8xf32> -> vector<2x8x8xf32>
    "tpu.trace_stop"() : () -> ()
    %278 = vector.shape_cast %277 : vector<2x8x8xf32> to vector<16x8xf32>
    %279 = vector.extract_strided_slice %216 {offsets = [16, 0], sizes = [8, 32], strides = [1, 1]} : vector<32x32xf32> to vector<8x32xf32>
    %cst_107 = arith.constant dense<0.000000e+00> : vector<16x32xf32>
    %280 = tpu.matmul %278, %279, %cst_107 {dimension_numbers = #tpu.dot_dimension_numbers<[1], [0], [0], [1], [0, 0, 1, 1], [], []>} : vector<16x8xf32>, vector<8x32xf32>, vector<16x32xf32> -> vector<16x32xf32>
    %281 = arith.addf %259, %280 : vector<16x32xf32>
    %282 = vector.extract_strided_slice %214 {offsets = [0, 24], sizes = [16, 8], strides = [1, 1]} : vector<16x96xf32> to vector<16x8xf32>
    %283 = vector.shape_cast %282 : vector<16x8xf32> to vector<2x8x8xf32>
    %284 = vector.extract_strided_slice %214 {offsets = [0, 56], sizes = [16, 8], strides = [1, 1]} : vector<16x96xf32> to vector<16x8xf32>
    %285 = vector.shape_cast %284 : vector<16x8xf32> to vector<2x8x8xf32>
    %286 = vector.extract_strided_slice %214 {offsets = [0, 88], sizes = [16, 8], strides = [1, 1]} : vector<16x96xf32> to vector<16x8xf32>
    %287 = vector.shape_cast %286 : vector<16x8xf32> to vector<2x8x8xf32>
    "tpu.trace_start"() <{level = 10 : i32, message = "bqd,bkd->bqk"}> : () -> ()
    %cst_108 = arith.constant dense<0.000000e+00> : vector<2x8x8xf32>
    %288 = tpu.matmul %283, %285, %cst_108 {dimension_numbers = #tpu.dot_dimension_numbers<[2], [2], [1], [1], [0, 0, 0, 1, 1, 1], [0], [0]>} : vector<2x8x8xf32>, vector<2x8x8xf32>, vector<2x8x8xf32> -> vector<2x8x8xf32>
    "tpu.trace_stop"() : () -> ()
    %cst_109 = arith.constant dense<0xFF800000> : vector<2x8xf32>
    %289 = vector.multi_reduction <maximumf>, %288, %cst_109 [2] : vector<2x8x8xf32> to vector<2x8xf32>
    %290 = vector.shape_cast %289 : vector<2x8xf32> to vector<2x8x1xf32>
    %291 = vector.broadcast %290 : vector<2x8x1xf32> to vector<2x8x8xf32>
    %292 = arith.subf %288, %291 : vector<2x8x8xf32>
    %293 = math.exp %292 : vector<2x8x8xf32>
    %cst_110 = arith.constant dense<0.000000e+00> : vector<2x8xf32>
    %294 = vector.multi_reduction <add>, %293, %cst_110 [2] : vector<2x8x8xf32> to vector<2x8xf32>
    %295 = vector.shape_cast %294 : vector<2x8xf32> to vector<2x8x1xf32>
    %296 = tpu.reciprocal %295 {approx = true} : vector<2x8x1xf32> -> vector<2x8x1xf32>
    %297 = vector.broadcast %296 : vector<2x8x1xf32> to vector<2x8x8xf32>
    %298 = arith.mulf %293, %297 : vector<2x8x8xf32>
    "tpu.trace_start"() <{level = 10 : i32, message = "bqk,bkd->bqd"}> : () -> ()
    %cst_111 = arith.constant dense<0.000000e+00> : vector<2x8x8xf32>
    %299 = tpu.matmul %298, %287, %cst_111 {dimension_numbers = #tpu.dot_dimension_numbers<[2], [1], [1], [2], [0, 0, 0, 1, 1, 2], [0], [0]>} : vector<2x8x8xf32>, vector<2x8x8xf32>, vector<2x8x8xf32> -> vector<2x8x8xf32>
    "tpu.trace_stop"() : () -> ()
    %300 = vector.shape_cast %299 : vector<2x8x8xf32> to vector<16x8xf32>
    %301 = vector.extract_strided_slice %216 {offsets = [24, 0], sizes = [8, 32], strides = [1, 1]} : vector<32x32xf32> to vector<8x32xf32>
    %cst_112 = arith.constant dense<0.000000e+00> : vector<16x32xf32>
    %302 = tpu.matmul %300, %301, %cst_112 {dimension_numbers = #tpu.dot_dimension_numbers<[1], [0], [0], [1], [0, 0, 1, 1], [], []>} : vector<16x8xf32>, vector<8x32xf32>, vector<16x32xf32> -> vector<16x32xf32>
    %303 = arith.addf %281, %302 : vector<16x32xf32>
    %304 = arith.addf %181, %303 : vector<16x32xf32>
    %c1_113 = arith.constant 1 : index
    %c0_114 = arith.constant 0 : index
    %c0_115 = arith.constant 0 : index
    %305 = vector.load %arg6[%c1_113, %c0_114, %c0_115] : memref<2x1x32xf32, #tpu.memory_space<vmem>>, vector<1x1x32xf32>
    %306 = vector.shape_cast %305 : vector<1x1x32xf32> to vector<1x32xf32>
    %307 = vector.broadcast %306 : vector<1x32xf32> to vector<16x32xf32>
    %308 = arith.addf %304, %307 : vector<16x32xf32>
    %c1_116 = arith.constant 1 : index
    %c0_117 = arith.constant 0 : index
    %c0_118 = arith.constant 0 : index
    %309 = vector.load %arg7[%c1_116, %c0_117, %c0_118] : memref<2x1x32xf32, #tpu.memory_space<vmem>>, vector<1x1x32xf32>
    %310 = vector.shape_cast %309 : vector<1x1x32xf32> to vector<1x32xf32>
    %c1_119 = arith.constant 1 : index
    %c0_120 = arith.constant 0 : index
    %c0_121 = arith.constant 0 : index
    %311 = vector.load %arg8[%c1_119, %c0_120, %c0_121] : memref<2x1x32xf32, #tpu.memory_space<vmem>>, vector<1x1x32xf32>
    %312 = vector.shape_cast %311 : vector<1x1x32xf32> to vector<1x32xf32>
    %cst_122 = arith.constant dense<0.000000e+00> : vector<16xf32>
    %313 = vector.multi_reduction <add>, %308, %cst_122 [1] : vector<16x32xf32> to vector<16xf32>
    %314 = vector.shape_cast %313 : vector<16xf32> to vector<16x1xf32>
    %cst_123 = arith.constant 3.200000e+01 : f32
    %315 = vector.broadcast %cst_123 : f32 to vector<16x1xf32>
    %316 = arith.divf %314, %315 : vector<16x1xf32>
    %317 = vector.broadcast %316 : vector<16x1xf32> to vector<16x32xf32>
    %318 = arith.subf %308, %317 : vector<16x32xf32>
    %319 = arith.mulf %318, %318 : vector<16x32xf32>
    %cst_124 = arith.constant dense<0.000000e+00> : vector<16xf32>
    %320 = vector.multi_reduction <add>, %319, %cst_124 [1] : vector<16x32xf32> to vector<16xf32>
    %321 = vector.shape_cast %320 : vector<16xf32> to vector<16x1xf32>
    %cst_125 = arith.constant 3.200000e+01 : f32
    %322 = vector.broadcast %cst_125 : f32 to vector<16x1xf32>
    %323 = arith.divf %321, %322 : vector<16x1xf32>
    %324 = vector.broadcast %316 : vector<16x1xf32> to vector<16x32xf32>
    %325 = arith.subf %308, %324 : vector<16x32xf32>
    %cst_126 = arith.constant 9.99999997E-7 : f32
    %326 = vector.broadcast %cst_126 : f32 to vector<16x1xf32>
    %327 = arith.addf %323, %326 : vector<16x1xf32>
    %328 = math.rsqrt %327 : vector<16x1xf32>
    %329 = vector.broadcast %328 : vector<16x1xf32> to vector<16x32xf32>
    %330 = arith.mulf %325, %329 : vector<16x32xf32>
    %331 = vector.broadcast %310 : vector<1x32xf32> to vector<16x32xf32>
    %332 = arith.mulf %330, %331 : vector<16x32xf32>
    %333 = vector.broadcast %312 : vector<1x32xf32> to vector<16x32xf32>
    %334 = arith.addf %332, %333 : vector<16x32xf32>
    %c1_127 = arith.constant 1 : index
    %c0_128 = arith.constant 0 : index
    %c0_129 = arith.constant 0 : index
    %335 = vector.load %arg9[%c1_127, %c0_128, %c0_129] : memref<2x32x64xf32, #tpu.memory_space<vmem>>, vector<1x32x64xf32>
    %336 = vector.shape_cast %335 : vector<1x32x64xf32> to vector<32x64xf32>
    %cst_130 = arith.constant dense<0.000000e+00> : vector<16x64xf32>
    %337 = tpu.matmul %334, %336, %cst_130 {dimension_numbers = #tpu.dot_dimension_numbers<[1], [0], [0], [1], [0, 0, 1, 1], [], []>} : vector<16x32xf32>, vector<32x64xf32>, vector<16x64xf32> -> vector<16x64xf32>
    %c1_131 = arith.constant 1 : index
    %c0_132 = arith.constant 0 : index
    %c0_133 = arith.constant 0 : index
    %338 = vector.load %arg10[%c1_131, %c0_132, %c0_133] : memref<2x1x64xf32, #tpu.memory_space<vmem>>, vector<1x1x64xf32>
    %339 = vector.shape_cast %338 : vector<1x1x64xf32> to vector<1x64xf32>
    %340 = vector.broadcast %339 : vector<1x64xf32> to vector<16x64xf32>
    %341 = arith.addf %337, %340 : vector<16x64xf32>
    %cst_134 = arith.constant 5.000000e-01 : f32
    %342 = vector.broadcast %cst_134 : f32 to vector<16x64xf32>
    %343 = arith.mulf %342, %341 : vector<16x64xf32>
    %cst_135 = arith.constant 4.471500e-02 : f32
    %344 = vector.broadcast %cst_135 : f32 to vector<16x64xf32>
    %345 = arith.mulf %344, %341 : vector<16x64xf32>
    %346 = arith.mulf %345, %341 : vector<16x64xf32>
    %347 = arith.mulf %346, %341 : vector<16x64xf32>
    %348 = arith.addf %341, %347 : vector<16x64xf32>
    %cst_136 = arith.constant 0.797884583 : f32
    %349 = vector.broadcast %cst_136 : f32 to vector<16x64xf32>
    %350 = arith.mulf %349, %348 : vector<16x64xf32>
    %351 = math.tanh %350 : vector<16x64xf32>
    %cst_137 = arith.constant 1.000000e+00 : f32
    %352 = vector.broadcast %cst_137 : f32 to vector<16x64xf32>
    %353 = arith.addf %352, %351 : vector<16x64xf32>
    %354 = arith.mulf %343, %353 : vector<16x64xf32>
    %c1_138 = arith.constant 1 : index
    %c0_139 = arith.constant 0 : index
    %c0_140 = arith.constant 0 : index
    %355 = vector.load %arg11[%c1_138, %c0_139, %c0_140] : memref<2x64x32xf32, #tpu.memory_space<vmem>>, vector<1x64x32xf32>
    %356 = vector.shape_cast %355 : vector<1x64x32xf32> to vector<64x32xf32>
    %cst_141 = arith.constant dense<0.000000e+00> : vector<16x32xf32>
    %357 = tpu.matmul %354, %356, %cst_141 {dimension_numbers = #tpu.dot_dimension_numbers<[1], [0], [0], [1], [0, 0, 1, 1], [], []>} : vector<16x64xf32>, vector<64x32xf32>, vector<16x32xf32> -> vector<16x32xf32>
    %c1_142 = arith.constant 1 : index
    %c0_143 = arith.constant 0 : index
    %c0_144 = arith.constant 0 : index
    %358 = vector.load %arg12[%c1_142, %c0_143, %c0_144] : memref<2x1x32xf32, #tpu.memory_space<vmem>>, vector<1x1x32xf32>
    %359 = vector.shape_cast %358 : vector<1x1x32xf32> to vector<1x32xf32>
    %360 = vector.broadcast %359 : vector<1x32xf32> to vector<16x32xf32>
    %361 = arith.addf %357, %360 : vector<16x32xf32>
    %362 = arith.addf %308, %361 : vector<16x32xf32>
    %c0_145 = arith.constant 0 : index
    %c0_146 = arith.constant 0 : index
    %363 = vector.load %arg13[%c0_145, %c0_146] : memref<16x32xf32, #tpu.memory_space<vmem>>, vector<16x32xf32>
    tpu.vector_store %arg13[%c0_145, %c0_146], %362 {strides = array<i32>} : memref<16x32xf32, #tpu.memory_space<vmem>>, vector<16x32xf32>,
    return
  }
}

</mosaic_0001>

<llo_original>
// kernel: tpu_custom_call.1
$region0: #{tpu_custom_call.1}
  #allocation0 [shape = 'u32[]', space=smem, size = 0x4, offset = 0x4, fixed_abs, tag = 'smem constant byte address 0x4 - core index']
  #allocation1 [shape = 'u32[72,128]{1,0:T(1,128)}', space=vmem, size = 0x9000, scoped, tag = 'internal scratch']
  %s0 = inlined_call_operand.hbm [shape: f32[16,32], index: 0, kind: input, shape index: {}]
  %s1 = inlined_call_operand.hbm [shape: f32[2,1,32], index: 1, kind: input, shape index: {}]
  %s2 = inlined_call_operand.hbm [shape: f32[2,1,32], index: 2, kind: input, shape index: {}]
  %s3 = inlined_call_operand.vmem [shape: f32[2,32,96], index: 3, kind: input, shape index: {}]
  %s4 = inlined_call_operand.vmem [shape: f32[2,1,96], index: 4, kind: input, shape index: {}]
  %s5 = inlined_call_operand.vmem [shape: f32[2,32,32], index: 5, kind: input, shape index: {}]
  %s6 = inlined_call_operand.vmem [shape: f32[2,1,32], index: 6, kind: input, shape index: {}]
  %s7 = inlined_call_operand.hbm [shape: f32[2,1,32], index: 7, kind: input, shape index: {}]
  %s8 = inlined_call_operand.hbm [shape: f32[2,1,32], index: 8, kind: input, shape index: {}]
  %s9 = inlined_call_operand.vmem [shape: f32[2,32,64], index: 9, kind: input, shape index: {}]
  %s10 = inlined_call_operand.vmem [shape: f32[2,1,64], index: 10, kind: input, shape index: {}]
  %s11 = inlined_call_operand.vmem [shape: f32[2,64,32], index: 11, kind: input, shape index: {}]
  %s12 = inlined_call_operand.vmem [shape: f32[2,1,32], index: 12, kind: input, shape index: {}]
  %s13 = inlined_call_operand.hbm [shape: f32[16,32], index: 13, kind: output, shape index: {}]
  %s14 = sld [smem:[#allocation0]]
  $region82: #{tpu_custom_call.1} parent=0
    _
  %s16 = ssub.s32 1, %s14
  %s17 = scalar_select 0, %s16, %s14
  $region1: #{tpu_custom_call.1} parent=0
    #allocation2 [shape = 'u8[8192]{0}', space=vmem, size = 0x2000, scoped, tag = 'input window, operand 0, single buffered']
    #allocation3 [shape = 's32[1]{0}', space=sflag, size = 0x4, scoped, tag = 'scoped memory for tpu_custom_call.1']
    #allocation4 [shape = 's32[1]{0}', space=sflag, size = 0x4, scoped, tag = 'scoped memory for tpu_custom_call.1']
    #allocation5 [shape = 'u8[1024]{0}', space=vmem, size = 0x400, scoped, tag = 'input window, operand 1, single buffered']
    #allocation6 [shape = 's32[1]{0}', space=sflag, size = 0x4, scoped, tag = 'scoped memory for tpu_custom_call.1']
    #allocation7 [shape = 'u8[1024]{0}', space=vmem, size = 0x400, scoped, tag = 'input window, operand 2, single buffered']
    #allocation8 [shape = 'u8[1024]{0}', space=vmem, size = 0x400, scoped, tag = 'input window, operand 7, single buffered']
    #allocation9 [shape = 's32[1]{0}', space=sflag, size = 0x4, scoped, tag = 'scoped memory for tpu_custom_call.1']
    #allocation10 [shape = 'u8[1024]{0}', space=vmem, size = 0x400, scoped, tag = 'input window, operand 8, single buffered']
    #allocation11 [shape = 'u8[8192]{0}', space=vmem, size = 0x2000, scoped, tag = 'output window, operand 0, single buffered']
    %18 = vsyncpa [#allocation3], 0
    %19 = vsyncpa [#allocation6], 0
    %20 = vsyncpa [#allocation9], 0
    %21 = vsyncpa [#allocation4], 0
    // Predicated region
    $region2: #{tpu_custom_call.1} parent=1 // pred_check
      _
    $region3: #{tpu_custom_call.1} parent=1 // pred_check_branch
      %23 = sbr.rel (0) target = $region5
    $region4: #{tpu_custom_call.1} parent=1 // pred_region
      %25 = vsyncadd [#allocation3], 0
      %s26 = sshll.u32 %s0, 4
      %s27 = int_to_ptr.hbm [resolvable:$true] %s26
      %s28 = sshll.u32 [#allocation2], 4
      %s29 = int_to_ptr.vmem [resolvable:$true] %s28
      %34 = dma.hbm_to_vmem [thread:$0]  %s27, 256, %s29, [#allocation3], 128, 128, 8
    $region5: #{tpu_custom_call.1} parent=1 // pred_fallthru
      _
    // Predicated region
    $region6: #{tpu_custom_call.1} parent=1 // pred_check
      _
    $region7: #{tpu_custom_call.1} parent=1 // pred_check_branch
      %36 = sbr.rel (0) target = $region9
    $region8: #{tpu_custom_call.1} parent=1 // pred_region
      %38 = vsyncadd [#allocation6], 0
      %s39 = sshll.u32 %s1, 4
      %s40 = int_to_ptr.hbm [resolvable:$true] %s39
      %s41 = sshll.u32 [#allocation5], 4
      %s42 = int_to_ptr.vmem [resolvable:$true] %s41
      %47 = dma.hbm_to_vmem [thread:$0]  %s40, 32, %s42, [#allocation6], 16, 16, 1
    $region9: #{tpu_custom_call.1} parent=1 // pred_fallthru
      _
    // Predicated region
    $region10: #{tpu_custom_call.1} parent=1 // pred_check
      _
    $region11: #{tpu_custom_call.1} parent=1 // pred_check_branch
      %49 = sbr.rel (0) target = $region13
    $region12: #{tpu_custom_call.1} parent=1 // pred_region
      %51 = vsyncadd [#allocation6], 0
      %s52 = sshll.u32 %s2, 4
      %s53 = int_to_ptr.hbm [resolvable:$true] %s52
      %s54 = sshll.u32 [#allocation7], 4
      %s55 = int_to_ptr.vmem [resolvable:$true] %s54
      %60 = dma.hbm_to_vmem [thread:$0]  %s53, 32, %s55, [#allocation6], 16, 16, 1
    $region13: #{tpu_custom_call.1} parent=1 // pred_fallthru
      _
    // Predicated region
    $region14: #{tpu_custom_call.1} parent=1 // pred_check
      _
    $region15: #{tpu_custom_call.1} parent=1 // pred_check_branch
      %62 = sbr.rel (0) target = $region17
    $region16: #{tpu_custom_call.1} parent=1 // pred_region
      _
    $region17: #{tpu_custom_call.1} parent=1 // pred_fallthru
      _
    // Predicated region
    $region18: #{tpu_custom_call.1} parent=1 // pred_check
      _
    $region19: #{tpu_custom_call.1} parent=1 // pred_check_branch
      %64 = sbr.rel (0) target = $region21
    $region20: #{tpu_custom_call.1} parent=1 // pred_region
      _
    $region21: #{tpu_custom_call.1} parent=1 // pred_fallthru
      _
    // Predicated region
    $region22: #{tpu_custom_call.1} parent=1 // pred_check
      _
    $region23: #{tpu_custom_call.1} parent=1 // pred_check_branch
      %66 = sbr.rel (0) target = $region25
    $region24: #{tpu_custom_call.1} parent=1 // pred_region
      _
    $region25: #{tpu_custom_call.1} parent=1 // pred_fallthru
      _
    // Predicated region
    $region26: #{tpu_custom_call.1} parent=1 // pred_check
      _
    $region27: #{tpu_custom_call.1} parent=1 // pred_check_branch
      %68 = sbr.rel (0) target = $region29
    $region28: #{tpu_custom_call.1} parent=1 // pred_region
      _
    $region29: #{tpu_custom_call.1} parent=1 // pred_fallthru
      _
    // Predicated region
    $region30: #{tpu_custom_call.1} parent=1 // pred_check
      _
    $region31: #{tpu_custom_call.1} parent=1 // pred_check_branch
      %70 = sbr.rel (0) target = $region33
    $region32: #{tpu_custom_call.1} parent=1 // pred_region
      %72 = vsyncadd [#allocation9], 0
      %s73 = sshll.u32 %s7, 4
      %s74 = int_to_ptr.hbm [resolvable:$true] %s73
      %s75 = sshll.u32 [#allocation8], 4
      %s76 = int_to_ptr.vmem [resolvable:$true] %s75
      %81 = dma.hbm_to_vmem [thread:$0]  %s74, 32, %s76, [#allocation9], 16, 16, 1
    $region33: #{tpu_custom_call.1} parent=1 // pred_fallthru
      _
    // Predicated region
    $region34: #{tpu_custom_call.1} parent=1 // pred_check
      _
    $region35: #{tpu_custom_call.1} parent=1 // pred_check_branch
      %83 = sbr.rel (0) target = $region37
    $region36: #{tpu_custom_call.1} parent=1 // pred_region
      %85 = vsyncadd [#allocation9], 0
      %s86 = sshll.u32 %s8, 4
      %s87 = int_to_ptr.hbm [resolvable:$true] %s86
      %s88 = sshll.u32 [#allocation10], 4
      %s89 = int_to_ptr.vmem [resolvable:$true] %s88
      %94 = dma.hbm_to_vmem [thread:$0]  %s87, 32, %s89, [#allocation9], 16, 16, 1
    $region37: #{tpu_custom_call.1} parent=1 // pred_fallthru
      _
    // Predicated region
    $region38: #{tpu_custom_call.1} parent=1 // pred_check
      _
    $region39: #{tpu_custom_call.1} parent=1 // pred_check_branch
      %96 = sbr.rel (0) target = $region41
    $region40: #{tpu_custom_call.1} parent=1 // pred_region
      _
    $region41: #{tpu_custom_call.1} parent=1 // pred_fallthru
      _
    // Predicated region
    $region42: #{tpu_custom_call.1} parent=1 // pred_check
      _
    $region43: #{tpu_custom_call.1} parent=1 // pred_check_branch
      %98 = sbr.rel (0) target = $region45
    $region44: #{tpu_custom_call.1} parent=1 // pred_region
      _
    $region45: #{tpu_custom_call.1} parent=1 // pred_fallthru
      _
    // Predicated region
    $region46: #{tpu_custom_call.1} parent=1 // pred_check
      _
    $region47: #{tpu_custom_call.1} parent=1 // pred_check_branch
      %100 = sbr.rel (0) target = $region49
    $region48: #{tpu_custom_call.1} parent=1 // pred_region
      _
    $region49: #{tpu_custom_call.1} parent=1 // pred_fallthru
      _
    // Predicated region
    $region50: #{tpu_custom_call.1} parent=1 // pred_check
      _
    $region51: #{tpu_custom_call.1} parent=1 // pred_check_branch
      %102 = sbr.rel (0) target = $region53
    $region52: #{tpu_custom_call.1} parent=1 // pred_region
      _
    $region53: #{tpu_custom_call.1} parent=1 // pred_fallthru
      _
    // Predicated region
    $region54: #{tpu_custom_call.1} parent=1 // pred_check
      _
    $region55: #{tpu_custom_call.1} parent=1 // pred_check_branch
      %104 = sbr.rel (0) target = $region57
    $region56: #{tpu_custom_call.1} parent=1 // pred_region
      %106 = dma.done [#allocation3], 256
    $region57: #{tpu_custom_call.1} parent=1 // pred_fallthru
      _
    // Predicated region
    $region58: #{tpu_custom_call.1} parent=1 // pred_check
      _
    $region59: #{tpu_custom_call.1} parent=1 // pred_check_branch
      %108 = sbr.rel (0) target = $region61
    $region60: #{tpu_custom_call.1} parent=1 // pred_region
      %110 = dma.done [#allocation6], 32
    $region61: #{tpu_custom_call.1} parent=1 // pred_fallthru
      _
    // Predicated region
    $region62: #{tpu_custom_call.1} parent=1 // pred_check
      _
    $region63: #{tpu_custom_call.1} parent=1 // pred_check_branch
      %112 = sbr.rel (0) target = $region65
    $region64: #{tpu_custom_call.1} parent=1 // pred_region
      %114 = dma.done [#allocation6], 32
    $region65: #{tpu_custom_call.1} parent=1 // pred_fallthru
      _
    // Predicated region
    $region66: #{tpu_custom_call.1} parent=1 // pred_check
      _
    $region67: #{tpu_custom_call.1} parent=1 // pred_check_branch
      %116 = sbr.rel (0) target = $region69
    $region68: #{tpu_custom_call.1} parent=1 // pred_region
      %118 = dma.done [#allocation9], 32
    $region69: #{tpu_custom_call.1} parent=1 // pred_fallthru
      _
    // Predicated region
    $region70: #{tpu_custom_call.1} parent=1 // pred_check
      _
    $region71: #{tpu_custom_call.1} parent=1 // pred_check_branch
      %120 = sbr.rel (0) target = $region73
    $region72: #{tpu_custom_call.1} parent=1 // pred_region
      %122 = dma.done [#allocation9], 32
    $region73: #{tpu_custom_call.1} parent=1 // pred_fallthru
      _
    %v123 = vld [vmem:[#allocation2] sm:$0xff]
    %v124 = vld [vmem:[#allocation2 + $0x8] sm:$0xff]
    %v125 = vld [vmem:[#allocation5] sm:$0x1]
    %v126 = vld [vmem:[#allocation7] sm:$0x1]
    %vm127 = vcmask 261120
    %v128 = vsel %vm127, %v123, 0.0
    %129 = vadd.xlane.f32.xlu0 %v128
    %v130 = vpop.xlane.xlu0 %129
    %v131 = vsel %vm127, %v124, 0.0
    %132 = vadd.xlane.f32.xlu0 %v131
    %v133 = vpop.xlane.xlu0 %132
    %v134 = vrcp.pop 32.0
    %v135 = vmul.f32 32.0, %v134
    %v136 = vsub.f32 1.0, %v135
    %v137 = vmul.f32 %v134, %v136
    %v138 = vadd.f32 %v134, %v137
    %vm139 = vweird.f32 %v134
    %v140 = vsel %vm139, %v134, %v138
    %v141 = vmul.f32 %v130, %v140
    %v142 = vmul.f32 %v133, %v140
    %v143 = vsub.f32 %v123, %v141
    %v144 = vsub.f32 %v124, %v142
    %v145 = vmul.f32 %v143, %v143
    %v146 = vmul.f32 %v144, %v144
    %v147 = vsel %vm127, %v145, 0.0
    %148 = vadd.xlane.f32.xlu0 %v147
    %v149 = vpop.xlane.xlu0 %148
    %v150 = vsel %vm127, %v146, 0.0
    %151 = vadd.xlane.f32.xlu0 %v150
    %v152 = vpop.xlane.xlu0 %151
    %v153 = vmul.f32 %v149, %v140
    %v154 = vmul.f32 %v152, %v140
    %v155 = vadd.f32 %v153, 1e-06
    %v156 = vadd.f32 %v154, 1e-06
    %v157 = vrsqrt.pop %v155
    %v158 = vmul.f32 %v157, %v155
    %v159 = vmul.f32 %v158, %v157
    %v160 = vmul.f32 0.5, %v159
    %v161 = vsub.f32 1.5, %v160
    %v162 = vmul.f32 %v157, %v161
    %vm163 = vweird.f32 %v155
    %vm164 = vweird.f32 %v157
    %vm165 = vmor %vm163, %vm164
    %v166 = vsel %vm165, %v157, %v162
    %v167 = vrsqrt.pop %v156
    %v168 = vmul.f32 %v167, %v156
    %v169 = vmul.f32 %v168, %v167
    %v170 = vmul.f32 0.5, %v169
    %v171 = vsub.f32 1.5, %v170
    %v172 = vmul.f32 %v167, %v171
    %vm173 = vweird.f32 %v156
    %vm174 = vweird.f32 %v167
    %vm175 = vmor %vm173, %vm174
    %v176 = vsel %vm175, %v167, %v172
    %v177 = vmul.f32 %v143, %v166
    %v178 = vmul.f32 %v144, %v176
    %v180 = vperm.slane %v125, 0
    %v182 = vmul.f32 %v177, %v180
    %v183 = vmul.f32 %v178, %v180
    %v185 = vperm.slane %v126, 0
    %v187 = vadd.f32 %v182, %v185
    %v188 = vadd.f32 %v183, %v185
    %v189 = vld [vmem:[%s3] sm:$0xff]
    %v190 = vld [vmem:[%s3 + $0x8] sm:$0xff]
    %v191 = vld [vmem:[%s3 + $0x10] sm:$0xff]
    %v192 = vld [vmem:[%s3 + $0x18] sm:$0xff]
    %v193 = vld [vmem:[%s4] sm:$0x1]
    %v195 = vperm.slane %v193, 0
    %v198 = vsel %vm127, %v187, 0
    %v201 = vsel %vm127, %v188, 0
    %203 = vmatpush.msra.mxu0 0.0
    %204 = vmatpush.msra.mxu0 0.0
    %205 = vmatpush.msra.mxu0 0.0
    %206 = vmatpush.msra.mxu0 0.0
    %207 = vmatpush.msra.mxu0 0.0
    %208 = vmatpush.msra.mxu0 0.0
    %209 = vmatpush.msra.mxu0 0.0
    %210 = vmatpush.msra.mxu0 0.0
    %211 = vmatpush.msra.mxu0 0.0
    %212 = vmatpush.msra.mxu0 0.0
    %213 = vmatpush.msra.mxu0 0.0
    %214 = vmatpush.msra.mxu0 0.0
    %215 = vmatpush.msra.mxu0 %v192
    %216 = vmatpush.msra.mxu0 %v191
    %217 = vmatpush.msra.mxu0 %v190
    %218 = vmatpush.msra.mxu0 %v189
    %219 = vmatmul.f32.gmra.mxu0 %v198
    %v220 = vpop.f32.mrf.mxu0
    %v221 = vadd.f32 %v195, %v220
    %222 = vmatmul.f32.gmra.mxu0 %v201
    %v223 = vpop.f32.mrf.mxu0
    %v224 = vadd.f32 %v195, %v223
    %225 = vdwg.mxu0
    %v226 = vld [vmem:[%s5] sm:$0xff]
    %v227 = vld [vmem:[%s5 + $0x8] sm:$0xff]
    %v228 = vld [vmem:[%s5 + $0x10] sm:$0xff]
    %v229 = vld [vmem:[%s5 + $0x18] sm:$0xff]
    %231 = vrot.lane.b32.xlu0 %v221, 96
    %v232 = vpop.permute.xlu0 %231
    %vm233 = vcmask 64512
    %v234 = vsel %vm233, %v221, 0
    %v236 = vsel %vm233, %v232, 0
    %238 = vmatpush.xpose.msra.mxu0 0.0
    %239 = vmatpush.xpose.msra.mxu0 0.0
    %240 = vmatpush.xpose.msra.mxu0 0.0
    %241 = vmatpush.xpose.msra.mxu0 0.0
    %242 = vmatpush.xpose.msra.mxu0 0.0
    %243 = vmatpush.xpose.msra.mxu0 0.0
    %244 = vmatpush.xpose.msra.mxu0 0.0
    %245 = vmatpush.xpose.msra.mxu0 0.0
    %246 = vmatpush.xpose.msra.mxu0 0.0
    %247 = vmatpush.xpose.msra.mxu0 0.0
    %248 = vmatpush.xpose.msra.mxu0 0.0
    %249 = vmatpush.xpose.msra.mxu0 0.0
    %250 = vmatpush.xpose.msra.mxu0 0.0
    %251 = vmatpush.xpose.msra.mxu0 0.0
    %252 = vmatpush.xpose.msra.mxu0 0.0
    %253 = vmatpush.xpose.msra.mxu0 %v236
    %254 = vmatmul.f32.gmra.mxu0 %v234
    %v255 = vpop.f32.mrf.mxu0
    %v256 = vadd.f32 0.0, %v255
    %257 = vdwg.mxu0
    %259 = vrot.lane.b32.xlu0 %v224, 96
    %v260 = vpop.permute.xlu0 %259
    %v261 = vsel %vm233, %v224, 0
    %v263 = vsel %vm233, %v260, 0
    %265 = vmatpush.xpose.msra.mxu0 0.0
    %266 = vmatpush.xpose.msra.mxu0 0.0
    %267 = vmatpush.xpose.msra.mxu0 0.0
    %268 = vmatpush.xpose.msra.mxu0 0.0
    %269 = vmatpush.xpose.msra.mxu0 0.0
    %270 = vmatpush.xpose.msra.mxu0 0.0
    %271 = vmatpush.xpose.msra.mxu0 0.0
    %272 = vmatpush.xpose.msra.mxu0 0.0
    %273 = vmatpush.xpose.msra.mxu0 0.0
    %274 = vmatpush.xpose.msra.mxu0 0.0
    %275 = vmatpush.xpose.msra.mxu0 0.0
    %276 = vmatpush.xpose.msra.mxu0 0.0
    %277 = vmatpush.xpose.msra.mxu0 0.0
    %278 = vmatpush.xpose.msra.mxu0 0.0
    %279 = vmatpush.xpose.msra.mxu0 0.0
    %280 = vmatpush.xpose.msra.mxu0 %v263
    %281 = vmatmul.f32.gmra.mxu0 %v261
    %v282 = vpop.f32.mrf.mxu0
    %v283 = vadd.f32 0.0, %v282
    %284 = vdwg.mxu0
    %v285 = vsel %vm233, %v256, -inf
    %286 = vmax.xlane.f32.xlu0 %v285
    %v287 = vpop.xlane.xlu0 %286
    %v288 = vsel %vm233, %v283, -inf
    %289 = vmax.xlane.f32.xlu0 %v288
    %v290 = vpop.xlane.xlu0 %289
    %v291 = vsub.f32 %v256, %v287
    %v292 = vsub.f32 %v283, %v290
    %v293 = vmul.f32 %v291, 1.442695
    %v294 = vpow.pop %v293
    %v295 = vmul.f32 %v292, 1.442695
    %v296 = vpow.pop %v295
    %v297 = vsel %vm233, %v294, 0.0
    %298 = vadd.xlane.f32.xlu0 %v297
    %v299 = vpop.xlane.xlu0 %298
    %v300 = vsel %vm233, %v296, 0.0
    %301 = vadd.xlane.f32.xlu0 %v300
    %v302 = vpop.xlane.xlu0 %301
    %v303 = vrcp.pop %v299
    %v304 = vrcp.pop %v302
    %v305 = vmul.f32 %v294, %v303
    %v306 = vmul.f32 %v296, %v304
    %307 = vrot.lane.b32.xlu0 %v221, 64
    %v308 = vpop.permute.xlu0 %307
    %v311 = vsel %vm233, %v305, 0
    %313 = vmatpush.msra.mxu0 0.0
    %314 = vmatpush.msra.mxu0 0.0
    %315 = vmatpush.msra.mxu0 0.0
    %316 = vmatpush.msra.mxu0 0.0
    %317 = vmatpush.msra.mxu0 0.0
    %318 = vmatpush.msra.mxu0 0.0
    %319 = vmatpush.msra.mxu0 0.0
    %320 = vmatpush.msra.mxu0 0.0
    %321 = vmatpush.msra.mxu0 0.0
    %322 = vmatpush.msra.mxu0 0.0
    %323 = vmatpush.msra.mxu0 0.0
    %324 = vmatpush.msra.mxu0 0.0
    %325 = vmatpush.msra.mxu0 0.0
    %326 = vmatpush.msra.mxu0 0.0
    %327 = vmatpush.msra.mxu0 0.0
    %328 = vmatpush.msra.mxu0 %v308
    %329 = vmatmul.f32.gmra.mxu0 %v311
    %v330 = vpop.f32.mrf.mxu0
    %v331 = vadd.f32 0.0, %v330
    %332 = vdwg.mxu0
    %333 = vrot.lane.b32.xlu0 %v224, 64
    %v334 = vpop.permute.xlu0 %333
    %v337 = vsel %vm233, %v306, 0
    %339 = vmatpush.msra.mxu0 0.0
    %340 = vmatpush.msra.mxu0 0.0
    %341 = vmatpush.msra.mxu0 0.0
    %342 = vmatpush.msra.mxu0 0.0
    %343 = vmatpush.msra.mxu0 0.0
    %344 = vmatpush.msra.mxu0 0.0
    %345 = vmatpush.msra.mxu0 0.0
    %346 = vmatpush.msra.mxu0 0.0
    %347 = vmatpush.msra.mxu0 0.0
    %348 = vmatpush.msra.mxu0 0.0
    %349 = vmatpush.msra.mxu0 0.0
    %350 = vmatpush.msra.mxu0 0.0
    %351 = vmatpush.msra.mxu0 0.0
    %352 = vmatpush.msra.mxu0 0.0
    %353 = vmatpush.msra.mxu0 0.0
    %354 = vmatpush.msra.mxu0 %v334
    %355 = vmatmul.f32.gmra.mxu0 %v337
    %v356 = vpop.f32.mrf.mxu0
    %v357 = vadd.f32 0.0, %v356
    %358 = vdwg.mxu0
    %359 = vrot.lane.b32.xlu0 %v221, 120
    %v360 = vpop.permute.xlu0 %359
    %361 = vrot.lane.b32.xlu0 %v221, 88
    %v362 = vpop.permute.xlu0 %361
    %v363 = vsel %vm233, %v360, 0
    %v365 = vsel %vm233, %v362, 0
    %367 = vmatpush.xpose.msra.mxu0 0.0
    %368 = vmatpush.xpose.msra.mxu0 0.0
    %369 = vmatpush.xpose.msra.mxu0 0.0
    %370 = vmatpush.xpose.msra.mxu0 0.0
    %371 = vmatpush.xpose.msra.mxu0 0.0
    %372 = vmatpush.xpose.msra.mxu0 0.0
    %373 = vmatpush.xpose.msra.mxu0 0.0
    %374 = vmatpush.xpose.msra.mxu0 0.0
    %375 = vmatpush.xpose.msra.mxu0 0.0
    %376 = vmatpush.xpose.msra.mxu0 0.0
    %377 = vmatpush.xpose.msra.mxu0 0.0
    %378 = vmatpush.xpose.msra.mxu0 0.0
    %379 = vmatpush.xpose.msra.mxu0 0.0
    %380 = vmatpush.xpose.msra.mxu0 0.0
    %381 = vmatpush.xpose.msra.mxu0 0.0
    %382 = vmatpush.xpose.msra.mxu0 %v365
    %383 = vmatmul.f32.gmra.mxu0 %v363
    %v384 = vpop.f32.mrf.mxu0
    %v385 = vadd.f32 0.0, %v384
    %386 = vdwg.mxu0
    %387 = vrot.lane.b32.xlu0 %v224, 120
    %v388 = vpop.permute.xlu0 %387
    %389 = vrot.lane.b32.xlu0 %v224, 88
    %v390 = vpop.permute.xlu0 %389
    %v391 = vsel %vm233, %v388, 0
    %v393 = vsel %vm233, %v390, 0
    %395 = vmatpush.xpose.msra.mxu0 0.0
    %396 = vmatpush.xpose.msra.mxu0 0.0
    %397 = vmatpush.xpose.msra.mxu0 0.0
    %398 = vmatpush.xpose.msra.mxu0 0.0
    %399 = vmatpush.xpose.msra.mxu0 0.0
    %400 = vmatpush.xpose.msra.mxu0 0.0
    %401 = vmatpush.xpose.msra.mxu0 0.0
    %402 = vmatpush.xpose.msra.mxu0 0.0
    %403 = vmatpush.xpose.msra.mxu0 0.0
    %404 = vmatpush.xpose.msra.mxu0 0.0
    %405 = vmatpush.xpose.msra.mxu0 0.0
    %406 = vmatpush.xpose.msra.mxu0 0.0
    %407 = vmatpush.xpose.msra.mxu0 0.0
    %408 = vmatpush.xpose.msra.mxu0 0.0
    %409 = vmatpush.xpose.msra.mxu0 0.0
    %410 = vmatpush.xpose.msra.mxu0 %v393
    %411 = vmatmul.f32.gmra.mxu0 %v391
    %v412 = vpop.f32.mrf.mxu0
    %v413 = vadd.f32 0.0, %v412
    %414 = vdwg.mxu0
    %v415 = vsel %vm233, %v385, -inf
    %416 = vmax.xlane.f32.xlu0 %v415
    %v417 = vpop.xlane.xlu0 %416
    %v418 = vsel %vm233, %v413, -inf
    %419 = vmax.xlane.f32.xlu0 %v418
    %v420 = vpop.xlane.xlu0 %419
    %v421 = vsub.f32 %v385, %v417
    %v422 = vsub.f32 %v413, %v420
    %v423 = vmul.f32 %v421, 1.442695
    %v424 = vpow.pop %v423
    %v425 = vmul.f32 %v422, 1.442695
    %v426 = vpow.pop %v425
    %v427 = vsel %vm233, %v424, 0.0
    %428 = vadd.xlane.f32.xlu0 %v427
    %v429 = vpop.xlane.xlu0 %428
    %v430 = vsel %vm233, %v426, 0.0
    %431 = vadd.xlane.f32.xlu0 %v430
    %v432 = vpop.xlane.xlu0 %431
    %v433 = vrcp.pop %v429
    %v434 = vrcp.pop %v432
    %v435 = vmul.f32 %v424, %v433
    %v436 = vmul.f32 %v426, %v434
    %437 = vrot.lane.b32.xlu0 %v221, 56
    %v438 = vpop.permute.xlu0 %437
    %v441 = vsel %vm233, %v435, 0
    %443 = vmatpush.msra.mxu0 0.0
    %444 = vmatpush.msra.mxu0 0.0
    %445 = vmatpush.msra.mxu0 0.0
    %446 = vmatpush.msra.mxu0 0.0
    %447 = vmatpush.msra.mxu0 0.0
    %448 = vmatpush.msra.mxu0 0.0
    %449 = vmatpush.msra.mxu0 0.0
    %450 = vmatpush.msra.mxu0 0.0
    %451 = vmatpush.msra.mxu0 0.0
    %452 = vmatpush.msra.mxu0 0.0
    %453 = vmatpush.msra.mxu0 0.0
    %454 = vmatpush.msra.mxu0 0.0
    %455 = vmatpush.msra.mxu0 0.0
    %456 = vmatpush.msra.mxu0 0.0
    %457 = vmatpush.msra.mxu0 0.0
    %458 = vmatpush.msra.mxu0 %v438
    %459 = vmatmul.f32.gmra.mxu0 %v441
    %v460 = vpop.f32.mrf.mxu0
    %v461 = vadd.f32 0.0, %v460
    %462 = vdwg.mxu0
    %463 = vrot.lane.b32.xlu0 %v224, 56
    %v464 = vpop.permute.xlu0 %463
    %v467 = vsel %vm233, %v436, 0
    %469 = vmatpush.msra.mxu0 0.0
    %470 = vmatpush.msra.mxu0 0.0
    %471 = vmatpush.msra.mxu0 0.0
    %472 = vmatpush.msra.mxu0 0.0
    %473 = vmatpush.msra.mxu0 0.0
    %474 = vmatpush.msra.mxu0 0.0
    %475 = vmatpush.msra.mxu0 0.0
    %476 = vmatpush.msra.mxu0 0.0
    %477 = vmatpush.msra.mxu0 0.0
    %478 = vmatpush.msra.mxu0 0.0
    %479 = vmatpush.msra.mxu0 0.0
    %480 = vmatpush.msra.mxu0 0.0
    %481 = vmatpush.msra.mxu0 0.0
    %482 = vmatpush.msra.mxu0 0.0
    %483 = vmatpush.msra.mxu0 0.0
    %484 = vmatpush.msra.mxu0 %v464
    %485 = vmatmul.f32.gmra.mxu0 %v467
    %v486 = vpop.f32.mrf.mxu0
    %v487 = vadd.f32 0.0, %v486
    %488 = vdwg.mxu0
    %v490 = vsel %vm233, %v461, 0
    %v493 = vsel %vm233, %v487, 0
    %495 = vmatpush.msra.mxu0 0.0
    %496 = vmatpush.msra.mxu0 0.0
    %497 = vmatpush.msra.mxu0 0.0
    %498 = vmatpush.msra.mxu0 0.0
    %499 = vmatpush.msra.mxu0 0.0
    %500 = vmatpush.msra.mxu0 0.0
    %501 = vmatpush.msra.mxu0 0.0
    %502 = vmatpush.msra.mxu0 0.0
    %503 = vmatpush.msra.mxu0 0.0
    %504 = vmatpush.msra.mxu0 0.0
    %505 = vmatpush.msra.mxu0 0.0
    %506 = vmatpush.msra.mxu0 0.0
    %507 = vmatpush.msra.mxu0 0.0
    %508 = vmatpush.msra.mxu0 0.0
    %509 = vmatpush.msra.mxu0 0.0
    %510 = vmatpush.msra.mxu0 %v227
    %511 = vmatmul.f32.gmra.mxu0 %v490
    %v512 = vpop.f32.mrf.mxu0
    %v513 = vadd.f32 0.0, %v512
    %514 = vmatmul.f32.gmra.mxu0 %v493
    %v515 = vpop.f32.mrf.mxu0
    %v516 = vadd.f32 0.0, %v515
    %517 = vdwg.mxu0
    %v519 = vsel %vm233, %v331, 0
    %v522 = vsel %vm233, %v357, 0
    %524 = vmatpush.msra.mxu0 0.0
    %525 = vmatpush.msra.mxu0 0.0
    %526 = vmatpush.msra.mxu0 0.0
    %527 = vmatpush.msra.mxu0 0.0
    %528 = vmatpush.msra.mxu0 0.0
    %529 = vmatpush.msra.mxu0 0.0
    %530 = vmatpush.msra.mxu0 0.0
    %531 = vmatpush.msra.mxu0 0.0
    %532 = vmatpush.msra.mxu0 0.0
    %533 = vmatpush.msra.mxu0 0.0
    %534 = vmatpush.msra.mxu0 0.0
    %535 = vmatpush.msra.mxu0 0.0
    %536 = vmatpush.msra.mxu0 0.0
    %537 = vmatpush.msra.mxu0 0.0
    %538 = vmatpush.msra.mxu0 0.0
    %539 = vmatpush.msra.mxu0 %v226
    %540 = vmatmul.f32.gmra.mxu0 %v519
    %v541 = vpop.f32.mrf.mxu0
    %v542 = vadd.f32 %v513, %v541
    %543 = vmatmul.f32.gmra.mxu0 %v522
    %v544 = vpop.f32.mrf.mxu0
    %v545 = vadd.f32 %v516, %v544
    %546 = vdwg.mxu0
    %547 = vrot.lane.b32.xlu0 %v221, 112
    %v548 = vpop.permute.xlu0 %547
    %549 = vrot.lane.b32.xlu0 %v221, 80
    %v550 = vpop.permute.xlu0 %549
    %v551 = vsel %vm233, %v548, 0
    %v553 = vsel %vm233, %v550, 0
    %555 = vmatpush.xpose.msra.mxu0 0.0
    %556 = vmatpush.xpose.msra.mxu0 0.0
    %557 = vmatpush.xpose.msra.mxu0 0.0
    %558 = vmatpush.xpose.msra.mxu0 0.0
    %559 = vmatpush.xpose.msra.mxu0 0.0
    %560 = vmatpush.xpose.msra.mxu0 0.0
    %561 = vmatpush.xpose.msra.mxu0 0.0
    %562 = vmatpush.xpose.msra.mxu0 0.0
    %563 = vmatpush.xpose.msra.mxu0 0.0
    %564 = vmatpush.xpose.msra.mxu0 0.0
    %565 = vmatpush.xpose.msra.mxu0 0.0
    %566 = vmatpush.xpose.msra.mxu0 0.0
    %567 = vmatpush.xpose.msra.mxu0 0.0
    %568 = vmatpush.xpose.msra.mxu0 0.0
    %569 = vmatpush.xpose.msra.mxu0 0.0
    %570 = vmatpush.xpose.msra.mxu0 %v553
    %571 = vmatmul.f32.gmra.mxu0 %v551
    %v572 = vpop.f32.mrf.mxu0
    %v573 = vadd.f32 0.0, %v572
    %574 = vdwg.mxu0
    %575 = vrot.lane.b32.xlu0 %v224, 112
    %v576 = vpop.permute.xlu0 %575
    %577 = vrot.lane.b32.xlu0 %v224, 80
    %v578 = vpop.permute.xlu0 %577
    %v579 = vsel %vm233, %v576, 0
    %v581 = vsel %vm233, %v578, 0
    %583 = vmatpush.xpose.msra.mxu0 0.0
    %584 = vmatpush.xpose.msra.mxu0 0.0
    %585 = vmatpush.xpose.msra.mxu0 0.0
    %586 = vmatpush.xpose.msra.mxu0 0.0
    %587 = vmatpush.xpose.msra.mxu0 0.0
    %588 = vmatpush.xpose.msra.mxu0 0.0
    %589 = vmatpush.xpose.msra.mxu0 0.0
    %590 = vmatpush.xpose.msra.mxu0 0.0
    %591 = vmatpush.xpose.msra.mxu0 0.0
    %592 = vmatpush.xpose.msra.mxu0 0.0
    %593 = vmatpush.xpose.msra.mxu0 0.0
    %594 = vmatpush.xpose.msra.mxu0 0.0
    %595 = vmatpush.xpose.msra.mxu0 0.0
    %596 = vmatpush.xpose.msra.mxu0 0.0
    %597 = vmatpush.xpose.msra.mxu0 0.0
    %598 = vmatpush.xpose.msra.mxu0 %v581
    %599 = vmatmul.f32.gmra.mxu0 %v579
    %v600 = vpop.f32.mrf.mxu0
    %v601 = vadd.f32 0.0, %v600
    %602 = vdwg.mxu0
    %v603 = vsel %vm233, %v573, -inf
    %604 = vmax.xlane.f32.xlu0 %v603
    %v605 = vpop.xlane.xlu0 %604
    %v606 = vsel %vm233, %v601, -inf
    %607 = vmax.xlane.f32.xlu0 %v606
    %v608 = vpop.xlane.xlu0 %607
    %v609 = vsub.f32 %v573, %v605
    %v610 = vsub.f32 %v601, %v608
    %v611 = vmul.f32 %v609, 1.442695
    %v612 = vpow.pop %v611
    %v613 = vmul.f32 %v610, 1.442695
    %v614 = vpow.pop %v613
    %v615 = vsel %vm233, %v612, 0.0
    %616 = vadd.xlane.f32.xlu0 %v615
    %v617 = vpop.xlane.xlu0 %616
    %v618 = vsel %vm233, %v614, 0.0
    %619 = vadd.xlane.f32.xlu0 %v618
    %v620 = vpop.xlane.xlu0 %619
    %v621 = vrcp.pop %v617
    %v622 = vrcp.pop %v620
    %v623 = vmul.f32 %v612, %v621
    %v624 = vmul.f32 %v614, %v622
    %625 = vrot.lane.b32.xlu0 %v221, 48
    %v626 = vpop.permute.xlu0 %625
    %v629 = vsel %vm233, %v623, 0
    %631 = vmatpush.msra.mxu0 0.0
    %632 = vmatpush.msra.mxu0 0.0
    %633 = vmatpush.msra.mxu0 0.0
    %634 = vmatpush.msra.mxu0 0.0
    %635 = vmatpush.msra.mxu0 0.0
    %636 = vmatpush.msra.mxu0 0.0
    %637 = vmatpush.msra.mxu0 0.0
    %638 = vmatpush.msra.mxu0 0.0
    %639 = vmatpush.msra.mxu0 0.0
    %640 = vmatpush.msra.mxu0 0.0
    %641 = vmatpush.msra.mxu0 0.0
    %642 = vmatpush.msra.mxu0 0.0
    %643 = vmatpush.msra.mxu0 0.0
    %644 = vmatpush.msra.mxu0 0.0
    %645 = vmatpush.msra.mxu0 0.0
    %646 = vmatpush.msra.mxu0 %v626
    %647 = vmatmul.f32.gmra.mxu0 %v629
    %v648 = vpop.f32.mrf.mxu0
    %v649 = vadd.f32 0.0, %v648
    %650 = vdwg.mxu0
    %651 = vrot.lane.b32.xlu0 %v224, 48
    %v652 = vpop.permute.xlu0 %651
    %v655 = vsel %vm233, %v624, 0
    %657 = vmatpush.msra.mxu0 0.0
    %658 = vmatpush.msra.mxu0 0.0
    %659 = vmatpush.msra.mxu0 0.0
    %660 = vmatpush.msra.mxu0 0.0
    %661 = vmatpush.msra.mxu0 0.0
    %662 = vmatpush.msra.mxu0 0.0
    %663 = vmatpush.msra.mxu0 0.0
    %664 = vmatpush.msra.mxu0 0.0
    %665 = vmatpush.msra.mxu0 0.0
    %666 = vmatpush.msra.mxu0 0.0
    %667 = vmatpush.msra.mxu0 0.0
    %668 = vmatpush.msra.mxu0 0.0
    %669 = vmatpush.msra.mxu0 0.0
    %670 = vmatpush.msra.mxu0 0.0
    %671 = vmatpush.msra.mxu0 0.0
    %672 = vmatpush.msra.mxu0 %v652
    %673 = vmatmul.f32.gmra.mxu0 %v655
    %v674 = vpop.f32.mrf.mxu0
    %v675 = vadd.f32 0.0, %v674
    %676 = vdwg.mxu0
    %v678 = vsel %vm233, %v649, 0
    %v681 = vsel %vm233, %v675, 0
    %683 = vmatpush.msra.mxu0 0.0
    %684 = vmatpush.msra.mxu0 0.0
    %685 = vmatpush.msra.mxu0 0.0
    %686 = vmatpush.msra.mxu0 0.0
    %687 = vmatpush.msra.mxu0 0.0
    %688 = vmatpush.msra.mxu0 0.0
    %689 = vmatpush.msra.mxu0 0.0
    %690 = vmatpush.msra.mxu0 0.0
    %691 = vmatpush.msra.mxu0 0.0
    %692 = vmatpush.msra.mxu0 0.0
    %693 = vmatpush.msra.mxu0 0.0
    %694 = vmatpush.msra.mxu0 0.0
    %695 = vmatpush.msra.mxu0 0.0
    %696 = vmatpush.msra.mxu0 0.0
    %697 = vmatpush.msra.mxu0 0.0
    %698 = vmatpush.msra.mxu0 %v228
    %699 = vmatmul.f32.gmra.mxu0 %v678
    %v700 = vpop.f32.mrf.mxu0
    %v701 = vadd.f32 0.0, %v700
    %702 = vmatmul.f32.gmra.mxu0 %v681
    %v703 = vpop.f32.mrf.mxu0
    %v704 = vadd.f32 0.0, %v703
    %705 = vdwg.mxu0
    %v706 = vadd.f32 %v542, %v701
    %v707 = vadd.f32 %v545, %v704
    %708 = vrot.lane.b32.xlu0 %v221, 104
    %v709 = vpop.permute.xlu0 %708
    %710 = vrot.lane.b32.xlu0 %v221, 72
    %v711 = vpop.permute.xlu0 %710
    %v712 = vsel %vm233, %v709, 0
    %v714 = vsel %vm233, %v711, 0
    %716 = vmatpush.xpose.msra.mxu0 0.0
    %717 = vmatpush.xpose.msra.mxu0 0.0
    %718 = vmatpush.xpose.msra.mxu0 0.0
    %719 = vmatpush.xpose.msra.mxu0 0.0
    %720 = vmatpush.xpose.msra.mxu0 0.0
    %721 = vmatpush.xpose.msra.mxu0 0.0
    %722 = vmatpush.xpose.msra.mxu0 0.0
    %723 = vmatpush.xpose.msra.mxu0 0.0
    %724 = vmatpush.xpose.msra.mxu0 0.0
    %725 = vmatpush.xpose.msra.mxu0 0.0
    %726 = vmatpush.xpose.msra.mxu0 0.0
    %727 = vmatpush.xpose.msra.mxu0 0.0
    %728 = vmatpush.xpose.msra.mxu0 0.0
    %729 = vmatpush.xpose.msra.mxu0 0.0
    %730 = vmatpush.xpose.msra.mxu0 0.0
    %731 = vmatpush.xpose.msra.mxu0 %v714
    %732 = vmatmul.f32.gmra.mxu0 %v712
    %v733 = vpop.f32.mrf.mxu0
    %v734 = vadd.f32 0.0, %v733
    %735 = vdwg.mxu0
    %736 = vrot.lane.b32.xlu0 %v224, 104
    %v737 = vpop.permute.xlu0 %736
    %738 = vrot.lane.b32.xlu0 %v224, 72
    %v739 = vpop.permute.xlu0 %738
    %v740 = vsel %vm233, %v737, 0
    %v742 = vsel %vm233, %v739, 0
    %744 = vmatpush.xpose.msra.mxu0 0.0
    %745 = vmatpush.xpose.msra.mxu0 0.0
    %746 = vmatpush.xpose.msra.mxu0 0.0
    %747 = vmatpush.xpose.msra.mxu0 0.0
    %748 = vmatpush.xpose.msra.mxu0 0.0
    %749 = vmatpush.xpose.msra.mxu0 0.0
    %750 = vmatpush.xpose.msra.mxu0 0.0
    %751 = vmatpush.xpose.msra.mxu0 0.0
    %752 = vmatpush.xpose.msra.mxu0 0.0
    %753 = vmatpush.xpose.msra.mxu0 0.0
    %754 = vmatpush.xpose.msra.mxu0 0.0
    %755 = vmatpush.xpose.msra.mxu0 0.0
    %756 = vmatpush.xpose.msra.mxu0 0.0
    %757 = vmatpush.xpose.msra.mxu0 0.0
    %758 = vmatpush.xpose.msra.mxu0 0.0
    %759 = vmatpush.xpose.msra.mxu0 %v742
    %760 = vmatmul.f32.gmra.mxu0 %v740
    %v761 = vpop.f32.mrf.mxu0
    %v762 = vadd.f32 0.0, %v761
    %763 = vdwg.mxu0
    %v764 = vsel %vm233, %v734, -inf
    %765 = vmax.xlane.f32.xlu0 %v764
    %v766 = vpop.xlane.xlu0 %765
    %v767 = vsel %vm233, %v762, -inf
    %768 = vmax.xlane.f32.xlu0 %v767
    %v769 = vpop.xlane.xlu0 %768
    %v770 = vsub.f32 %v734, %v766
    %v771 = vsub.f32 %v762, %v769
    %v772 = vmul.f32 %v770, 1.442695
    %v773 = vpow.pop %v772
    %v774 = vmul.f32 %v771, 1.442695
    %v775 = vpow.pop %v774
    %v776 = vsel %vm233, %v773, 0.0
    %777 = vadd.xlane.f32.xlu0 %v776
    %v778 = vpop.xlane.xlu0 %777
    %v779 = vsel %vm233, %v775, 0.0
    %780 = vadd.xlane.f32.xlu0 %v779
    %v781 = vpop.xlane.xlu0 %780
    %v782 = vrcp.pop %v778
    %v783 = vrcp.pop %v781
    %v784 = vmul.f32 %v773, %v782
    %v785 = vmul.f32 %v775, %v783
    %786 = vrot.lane.b32.xlu0 %v221, 40
    %v787 = vpop.permute.xlu0 %786
    %v790 = vsel %vm233, %v784, 0
    %792 = vmatpush.msra.mxu0 0.0
    %793 = vmatpush.msra.mxu0 0.0
    %794 = vmatpush.msra.mxu0 0.0
    %795 = vmatpush.msra.mxu0 0.0
    %796 = vmatpush.msra.mxu0 0.0
    %797 = vmatpush.msra.mxu0 0.0
    %798 = vmatpush.msra.mxu0 0.0
    %799 = vmatpush.msra.mxu0 0.0
    %800 = vmatpush.msra.mxu0 0.0
    %801 = vmatpush.msra.mxu0 0.0
    %802 = vmatpush.msra.mxu0 0.0
    %803 = vmatpush.msra.mxu0 0.0
    %804 = vmatpush.msra.mxu0 0.0
    %805 = vmatpush.msra.mxu0 0.0
    %806 = vmatpush.msra.mxu0 0.0
    %807 = vmatpush.msra.mxu0 %v787
    %808 = vmatmul.f32.gmra.mxu0 %v790
    %v809 = vpop.f32.mrf.mxu0
    %v810 = vadd.f32 0.0, %v809
    %811 = vdwg.mxu0
    %812 = vrot.lane.b32.xlu0 %v224, 40
    %v813 = vpop.permute.xlu0 %812
    %v816 = vsel %vm233, %v785, 0
    %818 = vmatpush.msra.mxu0 0.0
    %819 = vmatpush.msra.mxu0 0.0
    %820 = vmatpush.msra.mxu0 0.0
    %821 = vmatpush.msra.mxu0 0.0
    %822 = vmatpush.msra.mxu0 0.0
    %823 = vmatpush.msra.mxu0 0.0
    %824 = vmatpush.msra.mxu0 0.0
    %825 = vmatpush.msra.mxu0 0.0
    %826 = vmatpush.msra.mxu0 0.0
    %827 = vmatpush.msra.mxu0 0.0
    %828 = vmatpush.msra.mxu0 0.0
    %829 = vmatpush.msra.mxu0 0.0
    %830 = vmatpush.msra.mxu0 0.0
    %831 = vmatpush.msra.mxu0 0.0
    %832 = vmatpush.msra.mxu0 0.0
    %833 = vmatpush.msra.mxu0 %v813
    %834 = vmatmul.f32.gmra.mxu0 %v816
    %v835 = vpop.f32.mrf.mxu0
    %v836 = vadd.f32 0.0, %v835
    %837 = vdwg.mxu0
    %v839 = vsel %vm233, %v810, 0
    %v842 = vsel %vm233, %v836, 0
    %844 = vmatpush.msra.mxu0 0.0
    %845 = vmatpush.msra.mxu0 0.0
    %846 = vmatpush.msra.mxu0 0.0
    %847 = vmatpush.msra.mxu0 0.0
    %848 = vmatpush.msra.mxu0 0.0
    %849 = vmatpush.msra.mxu0 0.0
    %850 = vmatpush.msra.mxu0 0.0
    %851 = vmatpush.msra.mxu0 0.0
    %852 = vmatpush.msra.mxu0 0.0
    %853 = vmatpush.msra.mxu0 0.0
    %854 = vmatpush.msra.mxu0 0.0
    %855 = vmatpush.msra.mxu0 0.0
    %856 = vmatpush.msra.mxu0 0.0
    %857 = vmatpush.msra.mxu0 0.0
    %858 = vmatpush.msra.mxu0 0.0
    %859 = vmatpush.msra.mxu0 %v229
    %860 = vmatmul.f32.gmra.mxu0 %v839
    %v861 = vpop.f32.mrf.mxu0
    %v862 = vadd.f32 0.0, %v861
    %863 = vmatmul.f32.gmra.mxu0 %v842
    %v864 = vpop.f32.mrf.mxu0
    %v865 = vadd.f32 0.0, %v864
    %866 = vdwg.mxu0
    %v867 = vadd.f32 %v706, %v862
    %v868 = vadd.f32 %v707, %v865
    %v869 = vadd.f32 %v123, %v867
    %v870 = vadd.f32 %v124, %v868
    %v871 = vld [vmem:[%s6] sm:$0x1]
    %v873 = vperm.slane %v871, 0
    %v875 = vadd.f32 %v869, %v873
    %v876 = vadd.f32 %v870, %v873
    %v877 = vld [vmem:[#allocation8] sm:$0x1]
    %v878 = vld [vmem:[#allocation10] sm:$0x1]
    %v879 = vsel %vm127, %v875, 0.0
    %880 = vadd.xlane.f32.xlu0 %v879
    %v881 = vpop.xlane.xlu0 %880
    %v882 = vsel %vm127, %v876, 0.0
    %883 = vadd.xlane.f32.xlu0 %v882
    %v884 = vpop.xlane.xlu0 %883
    %v885 = vmul.f32 %v881, %v140
    %v886 = vmul.f32 %v884, %v140
    %v887 = vsub.f32 %v875, %v885
    %v888 = vsub.f32 %v876, %v886
    %v889 = vmul.f32 %v887, %v887
    %v890 = vmul.f32 %v888, %v888
    %v891 = vsel %vm127, %v889, 0.0
    %892 = vadd.xlane.f32.xlu0 %v891
    %v893 = vpop.xlane.xlu0 %892
    %v894 = vsel %vm127, %v890, 0.0
    %895 = vadd.xlane.f32.xlu0 %v894
    %v896 = vpop.xlane.xlu0 %895
    %v897 = vmul.f32 %v893, %v140
    %v898 = vmul.f32 %v896, %v140
    %v899 = vadd.f32 %v897, 1e-06
    %v900 = vadd.f32 %v898, 1e-06
    %v901 = vrsqrt.pop %v899
    %v902 = vmul.f32 %v901, %v899
    %v903 = vmul.f32 %v902, %v901
    %v904 = vmul.f32 0.5, %v903
    %v905 = vsub.f32 1.5, %v904
    %v906 = vmul.f32 %v901, %v905
    %vm907 = vweird.f32 %v899
    %vm908 = vweird.f32 %v901
    %vm909 = vmor %vm907, %vm908
    %v910 = vsel %vm909, %v901, %v906
    %v911 = vrsqrt.pop %v900
    %v912 = vmul.f32 %v911, %v900
    %v913 = vmul.f32 %v912, %v911
    %v914 = vmul.f32 0.5, %v913
    %v915 = vsub.f32 1.5, %v914
    %v916 = vmul.f32 %v911, %v915
    %vm917 = vweird.f32 %v900
    %vm918 = vweird.f32 %v911
    %vm919 = vmor %vm917, %vm918
    %v920 = vsel %vm919, %v911, %v916
    %v921 = vmul.f32 %v887, %v910
    %v922 = vmul.f32 %v888, %v920
    %v924 = vperm.slane %v877, 0
    %v926 = vmul.f32 %v921, %v924
    %v927 = vmul.f32 %v922, %v924
    %v929 = vperm.slane %v878, 0
    %v931 = vadd.f32 %v926, %v929
    %v932 = vadd.f32 %v927, %v929
    %v933 = vld [vmem:[%s9] sm:$0xff]
    %v934 = vld [vmem:[%s9 + $0x8] sm:$0xff]
    %v935 = vld [vmem:[%s9 + $0x10] sm:$0xff]
    %v936 = vld [vmem:[%s9 + $0x18] sm:$0xff]
    %v937 = vld [vmem:[%s10] sm:$0x1]
    %v939 = vperm.slane %v937, 0
    %v942 = vsel %vm127, %v931, 0
    %v945 = vsel %vm127, %v932, 0
    %947 = vmatpush.msra.mxu0 0.0
    %948 = vmatpush.msra.mxu0 0.0
    %949 = vmatpush.msra.mxu0 0.0
    %950 = vmatpush.msra.mxu0 0.0
    %951 = vmatpush.msra.mxu0 0.0
    %952 = vmatpush.msra.mxu0 0.0
    %953 = vmatpush.msra.mxu0 0.0
    %954 = vmatpush.msra.mxu0 0.0
    %955 = vmatpush.msra.mxu0 0.0
    %956 = vmatpush.msra.mxu0 0.0
    %957 = vmatpush.msra.mxu0 0.0
    %958 = vmatpush.msra.mxu0 0.0
    %959 = vmatpush.msra.mxu0 %v936
    %960 = vmatpush.msra.mxu0 %v935
    %961 = vmatpush.msra.mxu0 %v934
    %962 = vmatpush.msra.mxu0 %v933
    %963 = vmatmul.f32.gmra.mxu0 %v942
    %v964 = vpop.f32.mrf.mxu0
    %v965 = vadd.f32 %v939, %v964
    %966 = vmatmul.f32.gmra.mxu0 %v945
    %v967 = vpop.f32.mrf.mxu0
    %v968 = vadd.f32 %v939, %v967
    %969 = vdwg.mxu0
    %v970 = vmul.f32 %v965, 0.5
    %v971 = vmul.f32 %v968, 0.5
    %v972 = vmul.f32 %v965, 0.044715
    %v973 = vmul.f32 %v968, 0.044715
    %v974 = vmul.f32 %v972, %v965
    %v975 = vmul.f32 %v973, %v968
    %v976 = vmul.f32 %v974, %v965
    %v977 = vmul.f32 %v975, %v968
    %v978 = vadd.f32 %v965, %v976
    %v979 = vadd.f32 %v968, %v977
    %v980 = vmul.f32 %v978, 0.7978846
    %v981 = vmul.f32 %v979, 0.7978846
    %v982 = vtanh.pop %v980
    %v983 = vtanh.pop %v981
    %v984 = vadd.f32 %v982, 1.0
    %v985 = vadd.f32 %v983, 1.0
    %v986 = vmul.f32 %v970, %v984
    %v987 = vmul.f32 %v971, %v985
    %v988 = vld [vmem:[%s11] sm:$0xff]
    %v989 = vld [vmem:[%s11 + $0x8] sm:$0xff]
    %v990 = vld [vmem:[%s11 + $0x10] sm:$0xff]
    %v991 = vld [vmem:[%s11 + $0x18] sm:$0xff]
    %v992 = vld [vmem:[%s11 + $0x20] sm:$0xff]
    %v993 = vld [vmem:[%s11 + $0x28] sm:$0xff]
    %v994 = vld [vmem:[%s11 + $0x30] sm:$0xff]
    %v995 = vld [vmem:[%s11 + $0x38] sm:$0xff]
    %v996 = vld [vmem:[%s12] sm:$0x1]
    %v998 = vperm.slane %v996, 0
    %vm1000 = vcmask 523264
    %v1002 = vsel %vm1000, %v986, 0
    %v1005 = vsel %vm1000, %v987, 0
    %1007 = vmatpush.msra.mxu0 0.0
    %1008 = vmatpush.msra.mxu0 0.0
    %1009 = vmatpush.msra.mxu0 0.0
    %1010 = vmatpush.msra.mxu0 0.0
    %1011 = vmatpush.msra.mxu0 0.0
    %1012 = vmatpush.msra.mxu0 0.0
    %1013 = vmatpush.msra.mxu0 0.0
    %1014 = vmatpush.msra.mxu0 0.0
    %1015 = vmatpush.msra.mxu0 %v995
    %1016 = vmatpush.msra.mxu0 %v994
    %1017 = vmatpush.msra.mxu0 %v993
    %1018 = vmatpush.msra.mxu0 %v992
    %1019 = vmatpush.msra.mxu0 %v991
    %1020 = vmatpush.msra.mxu0 %v990
    %1021 = vmatpush.msra.mxu0 %v989
    %1022 = vmatpush.msra.mxu0 %v988
    %1023 = vmatmul.f32.gmra.mxu0 %v1002
    %v1024 = vpop.f32.mrf.mxu0
    %v1025 = vadd.f32 %v998, %v1024
    %1026 = vmatmul.f32.gmra.mxu0 %v1005
    %v1027 = vpop.f32.mrf.mxu0
    %v1028 = vadd.f32 %v998, %v1027
    %1029 = vdwg.mxu0
    %v1030 = vadd.f32 %v875, %v1025
    %v1031 = vadd.f32 %v876, %v1028
    %s1032 = scalar_lea.vmem [#allocation5], 1
    %v1033 = vld [vmem:[%s1032] sm:$0x1]
    %s1034 = scalar_lea.vmem [#allocation7], 1
    %v1035 = vld [vmem:[%s1034] sm:$0x1]
    %v1036 = vsel %vm127, %v1030, 0.0
    %1037 = vadd.xlane.f32.xlu0 %v1036
    %v1038 = vpop.xlane.xlu0 %1037
    %v1039 = vsel %vm127, %v1031, 0.0
    %1040 = vadd.xlane.f32.xlu0 %v1039
    %v1041 = vpop.xlane.xlu0 %1040
    %v1042 = vmul.f32 %v1038, %v140
    %v1043 = vmul.f32 %v1041, %v140
    %v1044 = vsub.f32 %v1030, %v1042
    %v1045 = vsub.f32 %v1031, %v1043
    %v1046 = vmul.f32 %v1044, %v1044
    %v1047 = vmul.f32 %v1045, %v1045
    %v1048 = vsel %vm127, %v1046, 0.0
    %1049 = vadd.xlane.f32.xlu0 %v1048
    %v1050 = vpop.xlane.xlu0 %1049
    %v1051 = vsel %vm127, %v1047, 0.0
    %1052 = vadd.xlane.f32.xlu0 %v1051
    %v1053 = vpop.xlane.xlu0 %1052
    %v1054 = vmul.f32 %v1050, %v140
    %v1055 = vmul.f32 %v1053, %v140
    %v1056 = vadd.f32 %v1054, 1e-06
    %v1057 = vadd.f32 %v1055, 1e-06
    %v1058 = vrsqrt.pop %v1056
    %v1059 = vmul.f32 %v1058, %v1056
    %v1060 = vmul.f32 %v1059, %v1058
    %v1061 = vmul.f32 0.5, %v1060
    %v1062 = vsub.f32 1.5, %v1061
    %v1063 = vmul.f32 %v1058, %v1062
    %vm1064 = vweird.f32 %v1056
    %vm1065 = vweird.f32 %v1058
    %vm1066 = vmor %vm1064, %vm1065
    %v1067 = vsel %vm1066, %v1058, %v1063
    %v1068 = vrsqrt.pop %v1057
    %v1069 = vmul.f32 %v1068, %v1057
    %v1070 = vmul.f32 %v1069, %v1068
    %v1071 = vmul.f32 0.5, %v1070
    %v1072 = vsub.f32 1.5, %v1071
    %v1073 = vmul.f32 %v1068, %v1072
    %vm1074 = vweird.f32 %v1057
    %vm1075 = vweird.f32 %v1068
    %vm1076 = vmor %vm1074, %vm1075
    %v1077 = vsel %vm1076, %v1068, %v1073
    %v1078 = vmul.f32 %v1044, %v1067
    %v1079 = vmul.f32 %v1045, %v1077
    %v1081 = vperm.slane %v1033, 0
    %v1083 = vmul.f32 %v1078, %v1081
    %v1084 = vmul.f32 %v1079, %v1081
    %v1086 = vperm.slane %v1035, 0
    %v1088 = vadd.f32 %v1083, %v1086
    %v1089 = vadd.f32 %v1084, %v1086
    %s1090 = scalar_lea.vmem %s3, 32
    %v1091 = vld [vmem:[%s1090] sm:$0xff]
    %v1092 = vld [vmem:[%s1090 + $0x8] sm:$0xff]
    %v1093 = vld [vmem:[%s1090 + $0x10] sm:$0xff]
    %v1094 = vld [vmem:[%s1090 + $0x18] sm:$0xff]
    %s1095 = scalar_lea.vmem %s4, 1
    %v1096 = vld [vmem:[%s1095] sm:$0x1]
    %v1098 = vperm.slane %v1096, 0
    %v1101 = vsel %vm127, %v1088, 0
    %v1104 = vsel %vm127, %v1089, 0
    %1106 = vmatpush.msra.mxu0 0.0
    %1107 = vmatpush.msra.mxu0 0.0
    %1108 = vmatpush.msra.mxu0 0.0
    %1109 = vmatpush.msra.mxu0 0.0
    %1110 = vmatpush.msra.mxu0 0.0
    %1111 = vmatpush.msra.mxu0 0.0
    %1112 = vmatpush.msra.mxu0 0.0
    %1113 = vmatpush.msra.mxu0 0.0
    %1114 = vmatpush.msra.mxu0 0.0
    %1115 = vmatpush.msra.mxu0 0.0
    %1116 = vmatpush.msra.mxu0 0.0
    %1117 = vmatpush.msra.mxu0 0.0
    %1118 = vmatpush.msra.mxu0 %v1094
    %1119 = vmatpush.msra.mxu0 %v1093
    %1120 = vmatpush.msra.mxu0 %v1092
    %1121 = vmatpush.msra.mxu0 %v1091
    %1122 = vmatmul.f32.gmra.mxu0 %v1101
    %v1123 = vpop.f32.mrf.mxu0
    %v1124 = vadd.f32 %v1098, %v1123
    %1125 = vmatmul.f32.gmra.mxu0 %v1104
    %v1126 = vpop.f32.mrf.mxu0
    %v1127 = vadd.f32 %v1098, %v1126
    %1128 = vdwg.mxu0
    %s1129 = scalar_lea.vmem %s5, 32
    %v1130 = vld [vmem:[%s1129] sm:$0xff]
    %v1131 = vld [vmem:[%s1129 + $0x8] sm:$0xff]
    %v1132 = vld [vmem:[%s1129 + $0x10] sm:$0xff]
    %v1133 = vld [vmem:[%s1129 + $0x18] sm:$0xff]
    %1135 = vrot.lane.b32.xlu0 %v1124, 96
    %v1136 = vpop.permute.xlu0 %1135
    %v1137 = vsel %vm233, %v1124, 0
    %v1139 = vsel %vm233, %v1136, 0
    %1141 = vmatpush.xpose.msra.mxu0 0.0
    %1142 = vmatpush.xpose.msra.mxu0 0.0
    %1143 = vmatpush.xpose.msra.mxu0 0.0
    %1144 = vmatpush.xpose.msra.mxu0 0.0
    %1145 = vmatpush.xpose.msra.mxu0 0.0
    %1146 = vmatpush.xpose.msra.mxu0 0.0
    %1147 = vmatpush.xpose.msra.mxu0 0.0
    %1148 = vmatpush.xpose.msra.mxu0 0.0
    %1149 = vmatpush.xpose.msra.mxu0 0.0
    %1150 = vmatpush.xpose.msra.mxu0 0.0
    %1151 = vmatpush.xpose.msra.mxu0 0.0
    %1152 = vmatpush.xpose.msra.mxu0 0.0
    %1153 = vmatpush.xpose.msra.mxu0 0.0
    %1154 = vmatpush.xpose.msra.mxu0 0.0
    %1155 = vmatpush.xpose.msra.mxu0 0.0
    %1156 = vmatpush.xpose.msra.mxu0 %v1139
    %1157 = vmatmul.f32.gmra.mxu0 %v1137
    %v1158 = vpop.f32.mrf.mxu0
    %v1159 = vadd.f32 0.0, %v1158
    %1160 = vdwg.mxu0
    %1162 = vrot.lane.b32.xlu0 %v1127, 96
    %v1163 = vpop.permute.xlu0 %1162
    %v1164 = vsel %vm233, %v1127, 0
    %v1166 = vsel %vm233, %v1163, 0
    %1168 = vmatpush.xpose.msra.mxu0 0.0
    %1169 = vmatpush.xpose.msra.mxu0 0.0
    %1170 = vmatpush.xpose.msra.mxu0 0.0
    %1171 = vmatpush.xpose.msra.mxu0 0.0
    %1172 = vmatpush.xpose.msra.mxu0 0.0
    %1173 = vmatpush.xpose.msra.mxu0 0.0
    %1174 = vmatpush.xpose.msra.mxu0 0.0
    %1175 = vmatpush.xpose.msra.mxu0 0.0
    %1176 = vmatpush.xpose.msra.mxu0 0.0
    %1177 = vmatpush.xpose.msra.mxu0 0.0
    %1178 = vmatpush.xpose.msra.mxu0 0.0
    %1179 = vmatpush.xpose.msra.mxu0 0.0
    %1180 = vmatpush.xpose.msra.mxu0 0.0
    %1181 = vmatpush.xpose.msra.mxu0 0.0
    %1182 = vmatpush.xpose.msra.mxu0 0.0
    %1183 = vmatpush.xpose.msra.mxu0 %v1166
    %1184 = vmatmul.f32.gmra.mxu0 %v1164
    %v1185 = vpop.f32.mrf.mxu0
    %v1186 = vadd.f32 0.0, %v1185
    %1187 = vdwg.mxu0
    %v1188 = vsel %vm233, %v1159, -inf
    %1189 = vmax.xlane.f32.xlu0 %v1188
    %v1190 = vpop.xlane.xlu0 %1189
    %v1191 = vsel %vm233, %v1186, -inf
    %1192 = vmax.xlane.f32.xlu0 %v1191
    %v1193 = vpop.xlane.xlu0 %1192
    %v1194 = vsub.f32 %v1159, %v1190
    %v1195 = vsub.f32 %v1186, %v1193
    %v1196 = vmul.f32 %v1194, 1.442695
    %v1197 = vpow.pop %v1196
    %v1198 = vmul.f32 %v1195, 1.442695
    %v1199 = vpow.pop %v1198
    %v1200 = vsel %vm233, %v1197, 0.0
    %1201 = vadd.xlane.f32.xlu0 %v1200
    %v1202 = vpop.xlane.xlu0 %1201
    %v1203 = vsel %vm233, %v1199, 0.0
    %1204 = vadd.xlane.f32.xlu0 %v1203
    %v1205 = vpop.xlane.xlu0 %1204
    %v1206 = vrcp.pop %v1202
    %v1207 = vrcp.pop %v1205
    %v1208 = vmul.f32 %v1197, %v1206
    %v1209 = vmul.f32 %v1199, %v1207
    %1210 = vrot.lane.b32.xlu0 %v1124, 64
    %v1211 = vpop.permute.xlu0 %1210
    %v1214 = vsel %vm233, %v1208, 0
    %1216 = vmatpush.msra.mxu0 0.0
    %1217 = vmatpush.msra.mxu0 0.0
    %1218 = vmatpush.msra.mxu0 0.0
    %1219 = vmatpush.msra.mxu0 0.0
    %1220 = vmatpush.msra.mxu0 0.0
    %1221 = vmatpush.msra.mxu0 0.0
    %1222 = vmatpush.msra.mxu0 0.0
    %1223 = vmatpush.msra.mxu0 0.0
    %1224 = vmatpush.msra.mxu0 0.0
    %1225 = vmatpush.msra.mxu0 0.0
    %1226 = vmatpush.msra.mxu0 0.0
    %1227 = vmatpush.msra.mxu0 0.0
    %1228 = vmatpush.msra.mxu0 0.0
    %1229 = vmatpush.msra.mxu0 0.0
    %1230 = vmatpush.msra.mxu0 0.0
    %1231 = vmatpush.msra.mxu0 %v1211
    %1232 = vmatmul.f32.gmra.mxu0 %v1214
    %v1233 = vpop.f32.mrf.mxu0
    %v1234 = vadd.f32 0.0, %v1233
    %1235 = vdwg.mxu0
    %1236 = vrot.lane.b32.xlu0 %v1127, 64
    %v1237 = vpop.permute.xlu0 %1236
    %v1240 = vsel %vm233, %v1209, 0
    %1242 = vmatpush.msra.mxu0 0.0
    %1243 = vmatpush.msra.mxu0 0.0
    %1244 = vmatpush.msra.mxu0 0.0
    %1245 = vmatpush.msra.mxu0 0.0
    %1246 = vmatpush.msra.mxu0 0.0
    %1247 = vmatpush.msra.mxu0 0.0
    %1248 = vmatpush.msra.mxu0 0.0
    %1249 = vmatpush.msra.mxu0 0.0
    %1250 = vmatpush.msra.mxu0 0.0
    %1251 = vmatpush.msra.mxu0 0.0
    %1252 = vmatpush.msra.mxu0 0.0
    %1253 = vmatpush.msra.mxu0 0.0
    %1254 = vmatpush.msra.mxu0 0.0
    %1255 = vmatpush.msra.mxu0 0.0
    %1256 = vmatpush.msra.mxu0 0.0
    %1257 = vmatpush.msra.mxu0 %v1237
    %1258 = vmatmul.f32.gmra.mxu0 %v1240
    %v1259 = vpop.f32.mrf.mxu0
    %v1260 = vadd.f32 0.0, %v1259
    %1261 = vdwg.mxu0
    %1262 = vrot.lane.b32.xlu0 %v1124, 120
    %v1263 = vpop.permute.xlu0 %1262
    %1264 = vrot.lane.b32.xlu0 %v1124, 88
    %v1265 = vpop.permute.xlu0 %1264
    %v1266 = vsel %vm233, %v1263, 0
    %v1268 = vsel %vm233, %v1265, 0
    %1270 = vmatpush.xpose.msra.mxu0 0.0
    %1271 = vmatpush.xpose.msra.mxu0 0.0
    %1272 = vmatpush.xpose.msra.mxu0 0.0
    %1273 = vmatpush.xpose.msra.mxu0 0.0
    %1274 = vmatpush.xpose.msra.mxu0 0.0
    %1275 = vmatpush.xpose.msra.mxu0 0.0
    %1276 = vmatpush.xpose.msra.mxu0 0.0
    %1277 = vmatpush.xpose.msra.mxu0 0.0
    %1278 = vmatpush.xpose.msra.mxu0 0.0
    %1279 = vmatpush.xpose.msra.mxu0 0.0
    %1280 = vmatpush.xpose.msra.mxu0 0.0
    %1281 = vmatpush.xpose.msra.mxu0 0.0
    %1282 = vmatpush.xpose.msra.mxu0 0.0
    %1283 = vmatpush.xpose.msra.mxu0 0.0
    %1284 = vmatpush.xpose.msra.mxu0 0.0
    %1285 = vmatpush.xpose.msra.mxu0 %v1268
    %1286 = vmatmul.f32.gmra.mxu0 %v1266
    %v1287 = vpop.f32.mrf.mxu0
    %v1288 = vadd.f32 0.0, %v1287
    %1289 = vdwg.mxu0
    %1290 = vrot.lane.b32.xlu0 %v1127, 120
    %v1291 = vpop.permute.xlu0 %1290
    %1292 = vrot.lane.b32.xlu0 %v1127, 88
    %v1293 = vpop.permute.xlu0 %1292
    %v1294 = vsel %vm233, %v1291, 0
    %v1296 = vsel %vm233, %v1293, 0
    %1298 = vmatpush.xpose.msra.mxu0 0.0
    %1299 = vmatpush.xpose.msra.mxu0 0.0
    %1300 = vmatpush.xpose.msra.mxu0 0.0
    %1301 = vmatpush.xpose.msra.mxu0 0.0
    %1302 = vmatpush.xpose.msra.mxu0 0.0
    %1303 = vmatpush.xpose.msra.mxu0 0.0
    %1304 = vmatpush.xpose.msra.mxu0 0.0
    %1305 = vmatpush.xpose.msra.mxu0 0.0
    %1306 = vmatpush.xpose.msra.mxu0 0.0
    %1307 = vmatpush.xpose.msra.mxu0 0.0
    %1308 = vmatpush.xpose.msra.mxu0 0.0
    %1309 = vmatpush.xpose.msra.mxu0 0.0
    %1310 = vmatpush.xpose.msra.mxu0 0.0
    %1311 = vmatpush.xpose.msra.mxu0 0.0
    %1312 = vmatpush.xpose.msra.mxu0 0.0
    %1313 = vmatpush.xpose.msra.mxu0 %v1296
    %1314 = vmatmul.f32.gmra.mxu0 %v1294
    %v1315 = vpop.f32.mrf.mxu0
    %v1316 = vadd.f32 0.0, %v1315
    %1317 = vdwg.mxu0
    %v1318 = vsel %vm233, %v1288, -inf
    %1319 = vmax.xlane.f32.xlu0 %v1318
    %v1320 = vpop.xlane.xlu0 %1319
    %v1321 = vsel %vm233, %v1316, -inf
    %1322 = vmax.xlane.f32.xlu0 %v1321
    %v1323 = vpop.xlane.xlu0 %1322
    %v1324 = vsub.f32 %v1288, %v1320
    %v1325 = vsub.f32 %v1316, %v1323
    %v1326 = vmul.f32 %v1324, 1.442695
    %v1327 = vpow.pop %v1326
    %v1328 = vmul.f32 %v1325, 1.442695
    %v1329 = vpow.pop %v1328
    %v1330 = vsel %vm233, %v1327, 0.0
    %1331 = vadd.xlane.f32.xlu0 %v1330
    %v1332 = vpop.xlane.xlu0 %1331
    %v1333 = vsel %vm233, %v1329, 0.0
    %1334 = vadd.xlane.f32.xlu0 %v1333
    %v1335 = vpop.xlane.xlu0 %1334
    %v1336 = vrcp.pop %v1332
    %v1337 = vrcp.pop %v1335
    %v1338 = vmul.f32 %v1327, %v1336
    %v1339 = vmul.f32 %v1329, %v1337
    %1340 = vrot.lane.b32.xlu0 %v1124, 56
    %v1341 = vpop.permute.xlu0 %1340
    %v1344 = vsel %vm233, %v1338, 0
    %1346 = vmatpush.msra.mxu0 0.0
    %1347 = vmatpush.msra.mxu0 0.0
    %1348 = vmatpush.msra.mxu0 0.0
    %1349 = vmatpush.msra.mxu0 0.0
    %1350 = vmatpush.msra.mxu0 0.0
    %1351 = vmatpush.msra.mxu0 0.0
    %1352 = vmatpush.msra.mxu0 0.0
    %1353 = vmatpush.msra.mxu0 0.0
    %1354 = vmatpush.msra.mxu0 0.0
    %1355 = vmatpush.msra.mxu0 0.0
    %1356 = vmatpush.msra.mxu0 0.0
    %1357 = vmatpush.msra.mxu0 0.0
    %1358 = vmatpush.msra.mxu0 0.0
    %1359 = vmatpush.msra.mxu0 0.0
    %1360 = vmatpush.msra.mxu0 0.0
    %1361 = vmatpush.msra.mxu0 %v1341
    %1362 = vmatmul.f32.gmra.mxu0 %v1344
    %v1363 = vpop.f32.mrf.mxu0
    %v1364 = vadd.f32 0.0, %v1363
    %1365 = vdwg.mxu0
    %1366 = vrot.lane.b32.xlu0 %v1127, 56
    %v1367 = vpop.permute.xlu0 %1366
    %v1370 = vsel %vm233, %v1339, 0
    %1372 = vmatpush.msra.mxu0 0.0
    %1373 = vmatpush.msra.mxu0 0.0
    %1374 = vmatpush.msra.mxu0 0.0
    %1375 = vmatpush.msra.mxu0 0.0
    %1376 = vmatpush.msra.mxu0 0.0
    %1377 = vmatpush.msra.mxu0 0.0
    %1378 = vmatpush.msra.mxu0 0.0
    %1379 = vmatpush.msra.mxu0 0.0
    %1380 = vmatpush.msra.mxu0 0.0
    %1381 = vmatpush.msra.mxu0 0.0
    %1382 = vmatpush.msra.mxu0 0.0
    %1383 = vmatpush.msra.mxu0 0.0
    %1384 = vmatpush.msra.mxu0 0.0
    %1385 = vmatpush.msra.mxu0 0.0
    %1386 = vmatpush.msra.mxu0 0.0
    %1387 = vmatpush.msra.mxu0 %v1367
    %1388 = vmatmul.f32.gmra.mxu0 %v1370
    %v1389 = vpop.f32.mrf.mxu0
    %v1390 = vadd.f32 0.0, %v1389
    %1391 = vdwg.mxu0
    %v1393 = vsel %vm233, %v1364, 0
    %v1396 = vsel %vm233, %v1390, 0
    %1398 = vmatpush.msra.mxu0 0.0
    %1399 = vmatpush.msra.mxu0 0.0
    %1400 = vmatpush.msra.mxu0 0.0
    %1401 = vmatpush.msra.mxu0 0.0
    %1402 = vmatpush.msra.mxu0 0.0
    %1403 = vmatpush.msra.mxu0 0.0
    %1404 = vmatpush.msra.mxu0 0.0
    %1405 = vmatpush.msra.mxu0 0.0
    %1406 = vmatpush.msra.mxu0 0.0
    %1407 = vmatpush.msra.mxu0 0.0
    %1408 = vmatpush.msra.mxu0 0.0
    %1409 = vmatpush.msra.mxu0 0.0
    %1410 = vmatpush.msra.mxu0 0.0
    %1411 = vmatpush.msra.mxu0 0.0
    %1412 = vmatpush.msra.mxu0 0.0
    %1413 = vmatpush.msra.mxu0 %v1131
    %1414 = vmatmul.f32.gmra.mxu0 %v1393
    %v1415 = vpop.f32.mrf.mxu0
    %v1416 = vadd.f32 0.0, %v1415
    %1417 = vmatmul.f32.gmra.mxu0 %v1396
    %v1418 = vpop.f32.mrf.mxu0
    %v1419 = vadd.f32 0.0, %v1418
    %1420 = vdwg.mxu0
    %v1422 = vsel %vm233, %v1234, 0
    %v1425 = vsel %vm233, %v1260, 0
    %1427 = vmatpush.msra.mxu0 0.0
    %1428 = vmatpush.msra.mxu0 0.0
    %1429 = vmatpush.msra.mxu0 0.0
    %1430 = vmatpush.msra.mxu0 0.0
    %1431 = vmatpush.msra.mxu0 0.0
    %1432 = vmatpush.msra.mxu0 0.0
    %1433 = vmatpush.msra.mxu0 0.0
    %1434 = vmatpush.msra.mxu0 0.0
    %1435 = vmatpush.msra.mxu0 0.0
    %1436 = vmatpush.msra.mxu0 0.0
    %1437 = vmatpush.msra.mxu0 0.0
    %1438 = vmatpush.msra.mxu0 0.0
    %1439 = vmatpush.msra.mxu0 0.0
    %1440 = vmatpush.msra.mxu0 0.0
    %1441 = vmatpush.msra.mxu0 0.0
    %1442 = vmatpush.msra.mxu0 %v1130
    %1443 = vmatmul.f32.gmra.mxu0 %v1422
    %v1444 = vpop.f32.mrf.mxu0
    %v1445 = vadd.f32 %v1416, %v1444
    %1446 = vmatmul.f32.gmra.mxu0 %v1425
    %v1447 = vpop.f32.mrf.mxu0
    %v1448 = vadd.f32 %v1419, %v1447
    %1449 = vdwg.mxu0
    %1450 = vrot.lane.b32.xlu0 %v1124, 112
    %v1451 = vpop.permute.xlu0 %1450
    %1452 = vrot.lane.b32.xlu0 %v1124, 80
    %v1453 = vpop.permute.xlu0 %1452
    %v1454 = vsel %vm233, %v1451, 0
    %v1456 = vsel %vm233, %v1453, 0
    %1458 = vmatpush.xpose.msra.mxu0 0.0
    %1459 = vmatpush.xpose.msra.mxu0 0.0
    %1460 = vmatpush.xpose.msra.mxu0 0.0
    %1461 = vmatpush.xpose.msra.mxu0 0.0
    %1462 = vmatpush.xpose.msra.mxu0 0.0
    %1463 = vmatpush.xpose.msra.mxu0 0.0
    %1464 = vmatpush.xpose.msra.mxu0 0.0
    %1465 = vmatpush.xpose.msra.mxu0 0.0
    %1466 = vmatpush.xpose.msra.mxu0 0.0
    %1467 = vmatpush.xpose.msra.mxu0 0.0
    %1468 = vmatpush.xpose.msra.mxu0 0.0
    %1469 = vmatpush.xpose.msra.mxu0 0.0
    %1470 = vmatpush.xpose.msra.mxu0 0.0
    %1471 = vmatpush.xpose.msra.mxu0 0.0
    %1472 = vmatpush.xpose.msra.mxu0 0.0
    %1473 = vmatpush.xpose.msra.mxu0 %v1456
    %1474 = vmatmul.f32.gmra.mxu0 %v1454
    %v1475 = vpop.f32.mrf.mxu0
    %v1476 = vadd.f32 0.0, %v1475
    %1477 = vdwg.mxu0
    %1478 = vrot.lane.b32.xlu0 %v1127, 112
    %v1479 = vpop.permute.xlu0 %1478
    %1480 = vrot.lane.b32.xlu0 %v1127, 80
    %v1481 = vpop.permute.xlu0 %1480
    %v1482 = vsel %vm233, %v1479, 0
    %v1484 = vsel %vm233, %v1481, 0
    %1486 = vmatpush.xpose.msra.mxu0 0.0
    %1487 = vmatpush.xpose.msra.mxu0 0.0
    %1488 = vmatpush.xpose.msra.mxu0 0.0
    %1489 = vmatpush.xpose.msra.mxu0 0.0
    %1490 = vmatpush.xpose.msra.mxu0 0.0
    %1491 = vmatpush.xpose.msra.mxu0 0.0
    %1492 = vmatpush.xpose.msra.mxu0 0.0
    %1493 = vmatpush.xpose.msra.mxu0 0.0
    %1494 = vmatpush.xpose.msra.mxu0 0.0
    %1495 = vmatpush.xpose.msra.mxu0 0.0
    %1496 = vmatpush.xpose.msra.mxu0 0.0
    %1497 = vmatpush.xpose.msra.mxu0 0.0
    %1498 = vmatpush.xpose.msra.mxu0 0.0
    %1499 = vmatpush.xpose.msra.mxu0 0.0
    %1500 = vmatpush.xpose.msra.mxu0 0.0
    %1501 = vmatpush.xpose.msra.mxu0 %v1484
    %1502 = vmatmul.f32.gmra.mxu0 %v1482
    %v1503 = vpop.f32.mrf.mxu0
    %v1504 = vadd.f32 0.0, %v1503
    %1505 = vdwg.mxu0
    %v1506 = vsel %vm233, %v1476, -inf
    %1507 = vmax.xlane.f32.xlu0 %v1506
    %v1508 = vpop.xlane.xlu0 %1507
    %v1509 = vsel %vm233, %v1504, -inf
    %1510 = vmax.xlane.f32.xlu0 %v1509
    %v1511 = vpop.xlane.xlu0 %1510
    %v1512 = vsub.f32 %v1476, %v1508
    %v1513 = vsub.f32 %v1504, %v1511
    %v1514 = vmul.f32 %v1512, 1.442695
    %v1515 = vpow.pop %v1514
    %v1516 = vmul.f32 %v1513, 1.442695
    %v1517 = vpow.pop %v1516
    %v1518 = vsel %vm233, %v1515, 0.0
    %1519 = vadd.xlane.f32.xlu0 %v1518
    %v1520 = vpop.xlane.xlu0 %1519
    %v1521 = vsel %vm233, %v1517, 0.0
    %1522 = vadd.xlane.f32.xlu0 %v1521
    %v1523 = vpop.xlane.xlu0 %1522
    %v1524 = vrcp.pop %v1520
    %v1525 = vrcp.pop %v1523
    %v1526 = vmul.f32 %v1515, %v1524
    %v1527 = vmul.f32 %v1517, %v1525
    %1528 = vrot.lane.b32.xlu0 %v1124, 48
    %v1529 = vpop.permute.xlu0 %1528
    %v1532 = vsel %vm233, %v1526, 0
    %1534 = vmatpush.msra.mxu0 0.0
    %1535 = vmatpush.msra.mxu0 0.0
    %1536 = vmatpush.msra.mxu0 0.0
    %1537 = vmatpush.msra.mxu0 0.0
    %1538 = vmatpush.msra.mxu0 0.0
    %1539 = vmatpush.msra.mxu0 0.0
    %1540 = vmatpush.msra.mxu0 0.0
    %1541 = vmatpush.msra.mxu0 0.0
    %1542 = vmatpush.msra.mxu0 0.0
    %1543 = vmatpush.msra.mxu0 0.0
    %1544 = vmatpush.msra.mxu0 0.0
    %1545 = vmatpush.msra.mxu0 0.0
    %1546 = vmatpush.msra.mxu0 0.0
    %1547 = vmatpush.msra.mxu0 0.0
    %1548 = vmatpush.msra.mxu0 0.0
    %1549 = vmatpush.msra.mxu0 %v1529
    %1550 = vmatmul.f32.gmra.mxu0 %v1532
    %v1551 = vpop.f32.mrf.mxu0
    %v1552 = vadd.f32 0.0, %v1551
    %1553 = vdwg.mxu0
    %1554 = vrot.lane.b32.xlu0 %v1127, 48
    %v1555 = vpop.permute.xlu0 %1554
    %v1558 = vsel %vm233, %v1527, 0
    %1560 = vmatpush.msra.mxu0 0.0
    %1561 = vmatpush.msra.mxu0 0.0
    %1562 = vmatpush.msra.mxu0 0.0
    %1563 = vmatpush.msra.mxu0 0.0
    %1564 = vmatpush.msra.mxu0 0.0
    %1565 = vmatpush.msra.mxu0 0.0
    %1566 = vmatpush.msra.mxu0 0.0
    %1567 = vmatpush.msra.mxu0 0.0
    %1568 = vmatpush.msra.mxu0 0.0
    %1569 = vmatpush.msra.mxu0 0.0
    %1570 = vmatpush.msra.mxu0 0.0
    %1571 = vmatpush.msra.mxu0 0.0
    %1572 = vmatpush.msra.mxu0 0.0
    %1573 = vmatpush.msra.mxu0 0.0
    %1574 = vmatpush.msra.mxu0 0.0
    %1575 = vmatpush.msra.mxu0 %v1555
    %1576 = vmatmul.f32.gmra.mxu0 %v1558
    %v1577 = vpop.f32.mrf.mxu0
    %v1578 = vadd.f32 0.0, %v1577
    %1579 = vdwg.mxu0
    %v1581 = vsel %vm233, %v1552, 0
    %v1584 = vsel %vm233, %v1578, 0
    %1586 = vmatpush.msra.mxu0 0.0
    %1587 = vmatpush.msra.mxu0 0.0
    %1588 = vmatpush.msra.mxu0 0.0
    %1589 = vmatpush.msra.mxu0 0.0
    %1590 = vmatpush.msra.mxu0 0.0
    %1591 = vmatpush.msra.mxu0 0.0
    %1592 = vmatpush.msra.mxu0 0.0
    %1593 = vmatpush.msra.mxu0 0.0
    %1594 = vmatpush.msra.mxu0 0.0
    %1595 = vmatpush.msra.mxu0 0.0
    %1596 = vmatpush.msra.mxu0 0.0
    %1597 = vmatpush.msra.mxu0 0.0
    %1598 = vmatpush.msra.mxu0 0.0
    %1599 = vmatpush.msra.mxu0 0.0
    %1600 = vmatpush.msra.mxu0 0.0
    %1601 = vmatpush.msra.mxu0 %v1132
    %1602 = vmatmul.f32.gmra.mxu0 %v1581
    %v1603 = vpop.f32.mrf.mxu0
    %v1604 = vadd.f32 0.0, %v1603
    %1605 = vmatmul.f32.gmra.mxu0 %v1584
    %v1606 = vpop.f32.mrf.mxu0
    %v1607 = vadd.f32 0.0, %v1606
    %1608 = vdwg.mxu0
    %v1609 = vadd.f32 %v1445, %v1604
    %v1610 = vadd.f32 %v1448, %v1607
    %1611 = vrot.lane.b32.xlu0 %v1124, 104
    %v1612 = vpop.permute.xlu0 %1611
    %1613 = vrot.lane.b32.xlu0 %v1124, 72
    %v1614 = vpop.permute.xlu0 %1613
    %v1615 = vsel %vm233, %v1612, 0
    %v1617 = vsel %vm233, %v1614, 0
    %1619 = vmatpush.xpose.msra.mxu0 0.0
    %1620 = vmatpush.xpose.msra.mxu0 0.0
    %1621 = vmatpush.xpose.msra.mxu0 0.0
    %1622 = vmatpush.xpose.msra.mxu0 0.0
    %1623 = vmatpush.xpose.msra.mxu0 0.0
    %1624 = vmatpush.xpose.msra.mxu0 0.0
    %1625 = vmatpush.xpose.msra.mxu0 0.0
    %1626 = vmatpush.xpose.msra.mxu0 0.0
    %1627 = vmatpush.xpose.msra.mxu0 0.0
    %1628 = vmatpush.xpose.msra.mxu0 0.0
    %1629 = vmatpush.xpose.msra.mxu0 0.0
    %1630 = vmatpush.xpose.msra.mxu0 0.0
    %1631 = vmatpush.xpose.msra.mxu0 0.0
    %1632 = vmatpush.xpose.msra.mxu0 0.0
    %1633 = vmatpush.xpose.msra.mxu0 0.0
    %1634 = vmatpush.xpose.msra.mxu0 %v1617
    %1635 = vmatmul.f32.gmra.mxu0 %v1615
    %v1636 = vpop.f32.mrf.mxu0
    %v1637 = vadd.f32 0.0, %v1636
    %1638 = vdwg.mxu0
    %1639 = vrot.lane.b32.xlu0 %v1127, 104
    %v1640 = vpop.permute.xlu0 %1639
    %1641 = vrot.lane.b32.xlu0 %v1127, 72
    %v1642 = vpop.permute.xlu0 %1641
    %v1643 = vsel %vm233, %v1640, 0
    %v1645 = vsel %vm233, %v1642, 0
    %1647 = vmatpush.xpose.msra.mxu0 0.0
    %1648 = vmatpush.xpose.msra.mxu0 0.0
    %1649 = vmatpush.xpose.msra.mxu0 0.0
    %1650 = vmatpush.xpose.msra.mxu0 0.0
    %1651 = vmatpush.xpose.msra.mxu0 0.0
    %1652 = vmatpush.xpose.msra.mxu0 0.0
    %1653 = vmatpush.xpose.msra.mxu0 0.0
    %1654 = vmatpush.xpose.msra.mxu0 0.0
    %1655 = vmatpush.xpose.msra.mxu0 0.0
    %1656 = vmatpush.xpose.msra.mxu0 0.0
    %1657 = vmatpush.xpose.msra.mxu0 0.0
    %1658 = vmatpush.xpose.msra.mxu0 0.0
    %1659 = vmatpush.xpose.msra.mxu0 0.0
    %1660 = vmatpush.xpose.msra.mxu0 0.0
    %1661 = vmatpush.xpose.msra.mxu0 0.0
    %1662 = vmatpush.xpose.msra.mxu0 %v1645
    %1663 = vmatmul.f32.gmra.mxu0 %v1643
    %v1664 = vpop.f32.mrf.mxu0
    %v1665 = vadd.f32 0.0, %v1664
    %1666 = vdwg.mxu0
    %v1667 = vsel %vm233, %v1637, -inf
    %1668 = vmax.xlane.f32.xlu0 %v1667
    %v1669 = vpop.xlane.xlu0 %1668
    %v1670 = vsel %vm233, %v1665, -inf
    %1671 = vmax.xlane.f32.xlu0 %v1670
    %v1672 = vpop.xlane.xlu0 %1671
    %v1673 = vsub.f32 %v1637, %v1669
    %v1674 = vsub.f32 %v1665, %v1672
    %v1675 = vmul.f32 %v1673, 1.442695
    %v1676 = vpow.pop %v1675
    %v1677 = vmul.f32 %v1674, 1.442695
    %v1678 = vpow.pop %v1677
    %v1679 = vsel %vm233, %v1676, 0.0
    %1680 = vadd.xlane.f32.xlu0 %v1679
    %v1681 = vpop.xlane.xlu0 %1680
    %v1682 = vsel %vm233, %v1678, 0.0
    %1683 = vadd.xlane.f32.xlu0 %v1682
    %v1684 = vpop.xlane.xlu0 %1683
    %v1685 = vrcp.pop %v1681
    %v1686 = vrcp.pop %v1684
    %v1687 = vmul.f32 %v1676, %v1685
    %v1688 = vmul.f32 %v1678, %v1686
    %1689 = vrot.lane.b32.xlu0 %v1124, 40
    %v1690 = vpop.permute.xlu0 %1689
    %v1693 = vsel %vm233, %v1687, 0
    %1695 = vmatpush.msra.mxu0 0.0
    %1696 = vmatpush.msra.mxu0 0.0
    %1697 = vmatpush.msra.mxu0 0.0
    %1698 = vmatpush.msra.mxu0 0.0
    %1699 = vmatpush.msra.mxu0 0.0
    %1700 = vmatpush.msra.mxu0 0.0
    %1701 = vmatpush.msra.mxu0 0.0
    %1702 = vmatpush.msra.mxu0 0.0
    %1703 = vmatpush.msra.mxu0 0.0
    %1704 = vmatpush.msra.mxu0 0.0
    %1705 = vmatpush.msra.mxu0 0.0
    %1706 = vmatpush.msra.mxu0 0.0
    %1707 = vmatpush.msra.mxu0 0.0
    %1708 = vmatpush.msra.mxu0 0.0
    %1709 = vmatpush.msra.mxu0 0.0
    %1710 = vmatpush.msra.mxu0 %v1690
    %1711 = vmatmul.f32.gmra.mxu0 %v1693
    %v1712 = vpop.f32.mrf.mxu0
    %v1713 = vadd.f32 0.0, %v1712
    %1714 = vdwg.mxu0
    %1715 = vrot.lane.b32.xlu0 %v1127, 40
    %v1716 = vpop.permute.xlu0 %1715
    %v1719 = vsel %vm233, %v1688, 0
    %1721 = vmatpush.msra.mxu0 0.0
    %1722 = vmatpush.msra.mxu0 0.0
    %1723 = vmatpush.msra.mxu0 0.0
    %1724 = vmatpush.msra.mxu0 0.0
    %1725 = vmatpush.msra.mxu0 0.0
    %1726 = vmatpush.msra.mxu0 0.0
    %1727 = vmatpush.msra.mxu0 0.0
    %1728 = vmatpush.msra.mxu0 0.0
    %1729 = vmatpush.msra.mxu0 0.0
    %1730 = vmatpush.msra.mxu0 0.0
    %1731 = vmatpush.msra.mxu0 0.0
    %1732 = vmatpush.msra.mxu0 0.0
    %1733 = vmatpush.msra.mxu0 0.0
    %1734 = vmatpush.msra.mxu0 0.0
    %1735 = vmatpush.msra.mxu0 0.0
    %1736 = vmatpush.msra.mxu0 %v1716
    %1737 = vmatmul.f32.gmra.mxu0 %v1719
    %v1738 = vpop.f32.mrf.mxu0
    %v1739 = vadd.f32 0.0, %v1738
    %1740 = vdwg.mxu0
    %v1742 = vsel %vm233, %v1713, 0
    %v1745 = vsel %vm233, %v1739, 0
    %1747 = vmatpush.msra.mxu0 0.0
    %1748 = vmatpush.msra.mxu0 0.0
    %1749 = vmatpush.msra.mxu0 0.0
    %1750 = vmatpush.msra.mxu0 0.0
    %1751 = vmatpush.msra.mxu0 0.0
    %1752 = vmatpush.msra.mxu0 0.0
    %1753 = vmatpush.msra.mxu0 0.0
    %1754 = vmatpush.msra.mxu0 0.0
    %1755 = vmatpush.msra.mxu0 0.0
    %1756 = vmatpush.msra.mxu0 0.0
    %1757 = vmatpush.msra.mxu0 0.0
    %1758 = vmatpush.msra.mxu0 0.0
    %1759 = vmatpush.msra.mxu0 0.0
    %1760 = vmatpush.msra.mxu0 0.0
    %1761 = vmatpush.msra.mxu0 0.0
    %1762 = vmatpush.msra.mxu0 %v1133
    %1763 = vmatmul.f32.gmra.mxu0 %v1742
    %v1764 = vpop.f32.mrf.mxu0
    %v1765 = vadd.f32 0.0, %v1764
    %1766 = vmatmul.f32.gmra.mxu0 %v1745
    %v1767 = vpop.f32.mrf.mxu0
    %v1768 = vadd.f32 0.0, %v1767
    %1769 = vdwg.mxu0
    %v1770 = vadd.f32 %v1609, %v1765
    %v1771 = vadd.f32 %v1610, %v1768
    %v1772 = vadd.f32 %v1030, %v1770
    %v1773 = vadd.f32 %v1031, %v1771
    %s1774 = scalar_lea.vmem %s6, 1
    %v1775 = vld [vmem:[%s1774] sm:$0x1]
    %v1777 = vperm.slane %v1775, 0
    %v1779 = vadd.f32 %v1772, %v1777
    %v1780 = vadd.f32 %v1773, %v1777
    %s1781 = scalar_lea.vmem [#allocation8], 1
    %v1782 = vld [vmem:[%s1781] sm:$0x1]
    %s1783 = scalar_lea.vmem [#allocation10], 1
    %v1784 = vld [vmem:[%s1783] sm:$0x1]
    %v1785 = vsel %vm127, %v1779, 0.0
    %1786 = vadd.xlane.f32.xlu0 %v1785
    %v1787 = vpop.xlane.xlu0 %1786
    %v1788 = vsel %vm127, %v1780, 0.0
    %1789 = vadd.xlane.f32.xlu0 %v1788
    %v1790 = vpop.xlane.xlu0 %1789
    %v1791 = vmul.f32 %v1787, %v140
    %v1792 = vmul.f32 %v1790, %v140
    %v1793 = vsub.f32 %v1779, %v1791
    %v1794 = vsub.f32 %v1780, %v1792
    %v1795 = vmul.f32 %v1793, %v1793
    %v1796 = vmul.f32 %v1794, %v1794
    %v1797 = vsel %vm127, %v1795, 0.0
    %1798 = vadd.xlane.f32.xlu0 %v1797
    %v1799 = vpop.xlane.xlu0 %1798
    %v1800 = vsel %vm127, %v1796, 0.0
    %1801 = vadd.xlane.f32.xlu0 %v1800
    %v1802 = vpop.xlane.xlu0 %1801
    %v1803 = vmul.f32 %v1799, %v140
    %v1804 = vmul.f32 %v1802, %v140
    %v1805 = vadd.f32 %v1803, 1e-06
    %v1806 = vadd.f32 %v1804, 1e-06
    %v1807 = vrsqrt.pop %v1805
    %v1808 = vmul.f32 %v1807, %v1805
    %v1809 = vmul.f32 %v1808, %v1807
    %v1810 = vmul.f32 0.5, %v1809
    %v1811 = vsub.f32 1.5, %v1810
    %v1812 = vmul.f32 %v1807, %v1811
    %vm1813 = vweird.f32 %v1805
    %vm1814 = vweird.f32 %v1807
    %vm1815 = vmor %vm1813, %vm1814
    %v1816 = vsel %vm1815, %v1807, %v1812
    %v1817 = vrsqrt.pop %v1806
    %v1818 = vmul.f32 %v1817, %v1806
    %v1819 = vmul.f32 %v1818, %v1817
    %v1820 = vmul.f32 0.5, %v1819
    %v1821 = vsub.f32 1.5, %v1820
    %v1822 = vmul.f32 %v1817, %v1821
    %vm1823 = vweird.f32 %v1806
    %vm1824 = vweird.f32 %v1817
    %vm1825 = vmor %vm1823, %vm1824
    %v1826 = vsel %vm1825, %v1817, %v1822
    %v1827 = vmul.f32 %v1793, %v1816
    %v1828 = vmul.f32 %v1794, %v1826
    %v1830 = vperm.slane %v1782, 0
    %v1832 = vmul.f32 %v1827, %v1830
    %v1833 = vmul.f32 %v1828, %v1830
    %v1835 = vperm.slane %v1784, 0
    %v1837 = vadd.f32 %v1832, %v1835
    %v1838 = vadd.f32 %v1833, %v1835
    %s1839 = scalar_lea.vmem %s9, 32
    %v1840 = vld [vmem:[%s1839] sm:$0xff]
    %v1841 = vld [vmem:[%s1839 + $0x8] sm:$0xff]
    %v1842 = vld [vmem:[%s1839 + $0x10] sm:$0xff]
    %v1843 = vld [vmem:[%s1839 + $0x18] sm:$0xff]
    %s1844 = scalar_lea.vmem %s10, 1
    %v1845 = vld [vmem:[%s1844] sm:$0x1]
    %v1847 = vperm.slane %v1845, 0
    %v1850 = vsel %vm127, %v1837, 0
    %v1853 = vsel %vm127, %v1838, 0
    %1855 = vmatpush.msra.mxu0 0.0
    %1856 = vmatpush.msra.mxu0 0.0
    %1857 = vmatpush.msra.mxu0 0.0
    %1858 = vmatpush.msra.mxu0 0.0
    %1859 = vmatpush.msra.mxu0 0.0
    %1860 = vmatpush.msra.mxu0 0.0
    %1861 = vmatpush.msra.mxu0 0.0
    %1862 = vmatpush.msra.mxu0 0.0
    %1863 = vmatpush.msra.mxu0 0.0
    %1864 = vmatpush.msra.mxu0 0.0
    %1865 = vmatpush.msra.mxu0 0.0
    %1866 = vmatpush.msra.mxu0 0.0
    %1867 = vmatpush.msra.mxu0 %v1843
    %1868 = vmatpush.msra.mxu0 %v1842
    %1869 = vmatpush.msra.mxu0 %v1841
    %1870 = vmatpush.msra.mxu0 %v1840
    %1871 = vmatmul.f32.gmra.mxu0 %v1850
    %v1872 = vpop.f32.mrf.mxu0
    %v1873 = vadd.f32 %v1847, %v1872
    %1874 = vmatmul.f32.gmra.mxu0 %v1853
    %v1875 = vpop.f32.mrf.mxu0
    %v1876 = vadd.f32 %v1847, %v1875
    %1877 = vdwg.mxu0
    %v1878 = vmul.f32 %v1873, 0.5
    %v1879 = vmul.f32 %v1876, 0.5
    %v1880 = vmul.f32 %v1873, 0.044715
    %v1881 = vmul.f32 %v1876, 0.044715
    %v1882 = vmul.f32 %v1880, %v1873
    %v1883 = vmul.f32 %v1881, %v1876
    %v1884 = vmul.f32 %v1882, %v1873
    %v1885 = vmul.f32 %v1883, %v1876
    %v1886 = vadd.f32 %v1873, %v1884
    %v1887 = vadd.f32 %v1876, %v1885
    %v1888 = vmul.f32 %v1886, 0.7978846
    %v1889 = vmul.f32 %v1887, 0.7978846
    %v1890 = vtanh.pop %v1888
    %v1891 = vtanh.pop %v1889
    %v1892 = vadd.f32 %v1890, 1.0
    %v1893 = vadd.f32 %v1891, 1.0
    %v1894 = vmul.f32 %v1878, %v1892
    %v1895 = vmul.f32 %v1879, %v1893
    %s1896 = scalar_lea.vmem %s11, 64
    %v1897 = vld [vmem:[%s1896] sm:$0xff]
    %v1898 = vld [vmem:[%s1896 + $0x8] sm:$0xff]
    %v1899 = vld [vmem:[%s1896 + $0x10] sm:$0xff]
    %v1900 = vld [vmem:[%s1896 + $0x18] sm:$0xff]
    %v1901 = vld [vmem:[%s1896 + $0x20] sm:$0xff]
    %v1902 = vld [vmem:[%s1896 + $0x28] sm:$0xff]
    %v1903 = vld [vmem:[%s1896 + $0x30] sm:$0xff]
    %v1904 = vld [vmem:[%s1896 + $0x38] sm:$0xff]
    %s1905 = scalar_lea.vmem %s12, 1
    %v1906 = vld [vmem:[%s1905] sm:$0x1]
    %v1908 = vperm.slane %v1906, 0
    %v1911 = vsel %vm1000, %v1894, 0
    %v1914 = vsel %vm1000, %v1895, 0
    %1916 = vmatpush.msra.mxu0 0.0
    %1917 = vmatpush.msra.mxu0 0.0
    %1918 = vmatpush.msra.mxu0 0.0
    %1919 = vmatpush.msra.mxu0 0.0
    %1920 = vmatpush.msra.mxu0 0.0
    %1921 = vmatpush.msra.mxu0 0.0
    %1922 = vmatpush.msra.mxu0 0.0
    %1923 = vmatpush.msra.mxu0 0.0
    %1924 = vmatpush.msra.mxu0 %v1904
    %1925 = vmatpush.msra.mxu0 %v1903
    %1926 = vmatpush.msra.mxu0 %v1902
    %1927 = vmatpush.msra.mxu0 %v1901
    %1928 = vmatpush.msra.mxu0 %v1900
    %1929 = vmatpush.msra.mxu0 %v1899
    %1930 = vmatpush.msra.mxu0 %v1898
    %1931 = vmatpush.msra.mxu0 %v1897
    %1932 = vmatmul.f32.gmra.mxu0 %v1911
    %v1933 = vpop.f32.mrf.mxu0
    %v1934 = vadd.f32 %v1908, %v1933
    %1935 = vmatmul.f32.gmra.mxu0 %v1914
    %v1936 = vpop.f32.mrf.mxu0
    %v1937 = vadd.f32 %v1908, %v1936
    %1938 = vdwg.mxu0
    %v1939 = vadd.f32 %v1779, %v1934
    %v1940 = vadd.f32 %v1780, %v1937
    %1941 = vst.msk [vmem:[#allocation11] sm:$0xff] %vm127, %v1939
    %1942 = vst.msk [vmem:[#allocation11 + $0x8] sm:$0xff] %vm127, %v1940
    // Predicated region
    $region74: #{tpu_custom_call.1} parent=1 // pred_check
      _
    $region75: #{tpu_custom_call.1} parent=1 // pred_check_branch
      %1944 = sbr.rel (0) target = $region77
    $region76: #{tpu_custom_call.1} parent=1 // pred_region
      %1946 = vsyncadd [#allocation4], 0
      %s1947 = sshll.u32 [#allocation11], 4
      %s1948 = int_to_ptr.vmem [resolvable:$true] %s1947
      %s1949 = sshll.u32 %s13, 4
      %s1950 = int_to_ptr.hbm [resolvable:$true] %s1949
      %1955 = dma.vmem_to_hbm [thread:$0]  %s1948, 256, %s1950, [#allocation4], 128, 128, 8
    $region77: #{tpu_custom_call.1} parent=1 // pred_fallthru
      _
    // Predicated region
    $region78: #{tpu_custom_call.1} parent=1 // pred_check
      _
    $region79: #{tpu_custom_call.1} parent=1 // pred_check_branch
      %1957 = sbr.rel (0) target = $region81
    $region80: #{tpu_custom_call.1} parent=1 // pred_region
      %1959 = dma.done [#allocation4], 256
    $region81: #{tpu_custom_call.1} parent=1 // pred_fallthru
      _
    %1960 = vsyncpa [#allocation3], 1
    %1961 = vsyncpa [#allocation6], 1
    %1962 = vsyncpa [#allocation9], 1
    %1963 = vsyncpa [#allocation4], 1

</llo_original>
